<compile_context>
chip_gen: v5e
topology: v5e:2x2
jax: 0.10.0
libtpu: 0.0.40
codegen_flags: <defaults>
</compile_context>

<pallas_src>
import functools

import jax
import jax.numpy as jnp
from jax import lax
from jax.experimental import pallas as pl
from jax.experimental.pallas import tpu as pltpu

N = 8            # nodes per graph
D = 32           # in_channels == out_channels (residuals require equality)
HEADS = 8        # GATConv heads (concat=False -> mean over heads)
FF = 128         # ff_hidden_dim
NEG_SLOPE = 0.2  # GATConv LeakyReLU negative slope
EPS = 1e-5       # LayerNorm eps
MASK = -1e30     # additive softmax mask for non-edges (float32 only)


def gat_encoder_kernel(x_ref, bias_ref, a_dst_ref, a_src_ref, w3_ref,
                       gat_b_ref, g1_ref, be1_ref, w1_ref, b1_ref,
                       w2_ref, b2_ref, g2_ref, be2_ref, o_ref, *, bg):
    a_dst = a_dst_ref[...]                 # [H, D]
    a_src = a_src_ref[...]                 # [H, D]
    w3 = w3_ref[...]                       # [H, D, D]  (already divided by HEADS)

    # ---------------- GATConv per graph (small static loop over the block) ----
    gat_rows = []
    for g in range(bg):
        x = x_ref[g]                       # [N, D]
        bias = bias_ref[g]                 # [N, N]: 0 on edges (dst,src), -1e30 else

        # alpha_*[h, n] = sum_d x[n, d] * a_*[h, d]   (A.B^T, no transposes)
        alpha_dst = jnp.einsum('hd,nd->hn', a_dst, x,
                               preferred_element_type=jnp.float32)   # [H, N]
        alpha_src = jnp.einsum('hd,nd->hn', a_src, x,
                               preferred_element_type=jnp.float32)   # [H, N]

        e = alpha_dst[:, :, None] + alpha_src[:, None, :]            # [H, Ndst, Nsrc]
        e = jnp.where(e >= 0.0, e, NEG_SLOPE * e)                    # LeakyReLU
        e = e + bias[None, :, :]                                     # mask non-edges
        e = e - jnp.max(e, axis=-1, keepdims=True)                   # stable softmax
        p = jnp.exp(e)                                               # exp(MASK) == 0
        attn = p * pl.reciprocal(jnp.sum(p, axis=-1, keepdims=True), approx=True)

        # aggregate source features: ONE matmul for all heads
        t = jnp.dot(attn.reshape(HEADS * N, N), x,
                    preferred_element_type=jnp.float32)              # [H*N, D]
        t3 = t.reshape(HEADS, N, D)                                  # [H, N, D]

        # per-head linear transform, batched over heads (w3 already / HEADS)
        hout = lax.dot_general(t3, w3,
                               dimension_numbers=(((2,), (1,)), ((0,), (0,))),
                               preferred_element_type=jnp.float32)   # [H, N, D]
        acc = hout[0]
        for hh in range(1, HEADS):       # 7 single-vreg adds (head mean), negligible
            acc = acc + hout[hh]
        gat_rows.append(acc)                                          # [N, D]

    gat = jnp.concatenate(gat_rows, axis=0) + gat_b_ref[...]          # [bg*N, D]

    # dropout = identity (eval mode)
    # ---------------- residual + LayerNorm1 (whole block at once) ----------------
    x_flat = x_ref[...].reshape(bg * N, D)
    y = gat + x_flat
    mu = jnp.mean(y, axis=-1, keepdims=True)
    var = jnp.mean((y - mu) ** 2, axis=-1, keepdims=True)
    y = (y - mu) * lax.rsqrt(var + EPS) * g1_ref[...] + be1_ref[...]

    # ---------------- FFN: Linear -> ReLU -> Linear ----------------
    f = jnp.dot(y, w1_ref[...], preferred_element_type=jnp.float32) + b1_ref[...]
    f = jnp.maximum(f, 0.0)
    f = jnp.dot(f, w2_ref[...], preferred_element_type=jnp.float32) + b2_ref[...]

    # ---------------- residual + LayerNorm2 ----------------
    z = f + y
    mu2 = jnp.mean(z, axis=-1, keepdims=True)
    var2 = jnp.mean((z - mu2) ** 2, axis=-1, keepdims=True)
    z = (z - mu2) * lax.rsqrt(var2 + EPS) * g2_ref[...] + be2_ref[...]

    o_ref[...] = z.reshape(bg, N, D).astype(o_ref.dtype)


def _const_spec(shape):
    nd = len(shape)
    return pl.BlockSpec(shape, lambda b, _nd=nd: (0,) * _nd)


def gat_transformer_encoder_layer(x, bias, folded_params, *, block_b=None):
    """x: [B, N, D], bias: [B, N, N] additive mask, folded_params from fold_params."""
    B = x.shape[0]
    if block_b is None:
        block_b = min(B, 4)
    assert B % block_b == 0, "batch must be divisible by block_b"
    in_specs = ([pl.BlockSpec((block_b, N, D), lambda b: (b, 0, 0)),
                 pl.BlockSpec((block_b, N, N), lambda b: (b, 0, 0))]
                + [_const_spec(p.shape) for p in folded_params])
    kernel = functools.partial(gat_encoder_kernel, bg=block_b)
    return pl.pallas_call(
        kernel,
        out_shape=jax.ShapeDtypeStruct((B, N, D), jnp.float32),
        grid=(B // block_b,),
        in_specs=in_specs,
        out_specs=pl.BlockSpec((block_b, N, D), lambda b: (b, 0, 0)),
        compiler_params=pltpu.CompilerParams(
            dimension_semantics=("parallel",)),
    )(x, bias, *folded_params)


def make_params(key):
    ks = jax.random.split(key, 8)
    scale = 0.1
    w_gat = jax.random.normal(ks[0], (D, HEADS * D), jnp.float32) * scale
    att_src = jax.random.normal(ks[1], (HEADS, D), jnp.float32) * scale
    att_dst = jax.random.normal(ks[2], (HEADS, D), jnp.float32) * scale
    gat_b = jax.random.normal(ks[3], (1, D), jnp.float32) * scale
    g1 = jnp.ones((1, D), jnp.float32)
    be1 = jnp.zeros((1, D), jnp.float32)
    w1 = jax.random.normal(ks[4], (D, FF), jnp.float32) * scale
    b1 = jax.random.normal(ks[5], (1, FF), jnp.float32) * scale
    w2 = jax.random.normal(ks[6], (FF, D), jnp.float32) * scale
    b2 = jax.random.normal(ks[7], (1, D), jnp.float32) * scale
    g2 = jnp.ones((1, D), jnp.float32)
    be2 = jnp.zeros((1, D), jnp.float32)
    return (w_gat, att_src, att_dst, gat_b, g1, be1, w1, b1, w2, b2, g2, be2)


def fold_params(params):
    """Host-side algebraic folding (free at call time, mathematically identical):
       a_dst_t/a_src_t = (W_h^T att_h) per head, w3 = per-head W blocks / HEADS."""
    (w_gat, att_src, att_dst, gat_b, g1, be1, w1, b1, w2, b2, g2, be2) = params
    w_heads = w_gat.reshape(D, HEADS, D)                      # [Din, H, Dout]
    a_dst_t = jnp.einsum('khc,hc->hk', w_heads, att_dst)      # [H, Din]
    a_src_t = jnp.einsum('khc,hc->hk', w_heads, att_src)      # [H, Din]
    w3 = jnp.transpose(w_heads, (1, 0, 2)) / HEADS            # [H, Din, Dout]
    return (a_dst_t, a_src_t, w3, gat_b, g1, be1, w1, b1, w2, b2, g2, be2)


def _ln(v, g, b):
    mu = jnp.mean(v, axis=-1, keepdims=True)
    var = jnp.mean((v - mu) ** 2, axis=-1, keepdims=True)
    return (v - mu) / jnp.sqrt(var + EPS) * g + b


def reference_forward(x, adj, params):
    """Pure-JAX reference using the UNFOLDED params (validates folding + kernel)."""
    (w_gat, att_src, att_dst, gat_b, g1, be1, w1, b1, w2, b2, g2, be2) = params
    B = x.shape[0]
    xw = jnp.einsum('bnd,dk->bnk', x, w_gat).reshape(B, N, HEADS, D)   # [B,N,H,D]
    a_s = jnp.einsum('bnhd,hd->bnh', xw, att_src)                      # [B,N,H]
    a_d = jnp.einsum('bnhd,hd->bnh', xw, att_dst)                      # [B,N,H]
    e = a_d[:, :, None, :] + a_s[:, None, :, :]                        # [B,dst,src,H]
    e = jnp.where(e >= 0.0, e, NEG_SLOPE * e)
    e = jnp.where(adj[None, :, :, None] > 0.0, e, -jnp.inf)
    attn = jax.nn.softmax(e, axis=2)                                   # over src
    out = jnp.einsum('bijh,bjhd->bihd', attn, xw)                      # [B,N,H,D]
    gat = out.mean(axis=2) + gat_b                                     # [B,N,D]
    y = _ln(gat + x, g1, be1)
    f = jnp.maximum(jnp.einsum('bnd,df->bnf', y, w1) + b1, 0.0)
    f = jnp.einsum('bnf,fd->bnd', f, w2) + b2
    return _ln(f + y, g2, be2)


if __name__ == "__main__":
    key = jax.random.PRNGKey(0)
    kx, kp = jax.random.split(key)

    B = 4                                        # batch of graphs
    x = jax.random.normal(kx, (B, N, D), jnp.float32)

    # deterministic bidirectional ring graph as edge_index [2, E], densified to
    # adj[dst, src] with self loops (GATConv add_self_loops=True), packed on the
    # host as an additive softmax mask.
    src = jnp.arange(N)
    dst = (src + 1) % N
    edge_index = jnp.stack([jnp.concatenate([src, dst]),
                            jnp.concatenate([dst, src])])      # [2, 2N]
    adj = jnp.zeros((N, N), jnp.float32).at[edge_index[1], edge_index[0]].set(1.0)
    adj = jnp.maximum(adj, jnp.eye(N, dtype=jnp.float32))
    bias = jnp.where(adj > 0.0, 0.0, MASK).astype(jnp.float32)
    bias = jnp.tile(bias[None], (B, 1, 1))                     # same graph per batch entry

    params = make_params(kp)
    folded = fold_params(params)

    out = gat_transformer_encoder_layer(x, bias, folded, block_b=2)
    jax.block_until_ready(out)

    ref = reference_forward(x, adj, params)
    err = float(jnp.max(jnp.abs(out - ref)))

    assert out.shape == (B, N, D)
    assert bool(jnp.all(jnp.isfinite(out)))
    assert err < 1e-2, f"max abs err vs reference: {err}"
    print("KERNEL_OK")
</pallas_src>

<mosaic_0001>
module attributes {stable_mosaic.version = 11 : i64} {
  func.func @gat_encoder_kernel(%arg0: i32, %arg1: memref<2x8x32xf32, #tpu.memory_space<vmem>>, %arg2: memref<2x8x8xf32, #tpu.memory_space<vmem>>, %arg3: memref<8x32xf32, #tpu.memory_space<vmem>>, %arg4: memref<8x32xf32, #tpu.memory_space<vmem>>, %arg5: memref<8x32x32xf32, #tpu.memory_space<vmem>>, %arg6: memref<1x32xf32, #tpu.memory_space<vmem>>, %arg7: memref<1x32xf32, #tpu.memory_space<vmem>>, %arg8: memref<1x32xf32, #tpu.memory_space<vmem>>, %arg9: memref<32x128xf32, #tpu.memory_space<vmem>>, %arg10: memref<1x128xf32, #tpu.memory_space<vmem>>, %arg11: memref<128x32xf32, #tpu.memory_space<vmem>>, %arg12: memref<1x32xf32, #tpu.memory_space<vmem>>, %arg13: memref<1x32xf32, #tpu.memory_space<vmem>>, %arg14: memref<1x32xf32, #tpu.memory_space<vmem>>, %arg15: memref<2x8x32xf32, #tpu.memory_space<vmem>>) attributes {dimension_semantics = [#tpu.dimension_semantics<parallel>], iteration_bounds = array<i64: 2>, scalar_prefetch = 0 : i64, scratch_operands = 0 : i64, tpu.core_type = #tpu.core_type<tc>, window_params = [{transform_indices = @transform_0, window_bounds = array<i64: 2, 8, 32>}, {transform_indices = @transform_1, window_bounds = array<i64: 2, 8, 8>}, {pipeline_mode = #tpu.pipeline_mode<synchronous>, transform_indices = @transform_2, window_bounds = array<i64: 8, 32>}, {pipeline_mode = #tpu.pipeline_mode<synchronous>, transform_indices = @transform_3, window_bounds = array<i64: 8, 32>}, {pipeline_mode = #tpu.pipeline_mode<synchronous>, transform_indices = @transform_4, window_bounds = array<i64: 8, 32, 32>}, {pipeline_mode = #tpu.pipeline_mode<synchronous>, transform_indices = @transform_5, window_bounds = array<i64: 1, 32>}, {pipeline_mode = #tpu.pipeline_mode<synchronous>, transform_indices = @transform_6, window_bounds = array<i64: 1, 32>}, {pipeline_mode = #tpu.pipeline_mode<synchronous>, transform_indices = @transform_7, window_bounds = array<i64: 1, 32>}, {pipeline_mode = #tpu.pipeline_mode<synchronous>, transform_indices = @transform_8, window_bounds = array<i64: 32, 128>}, {pipeline_mode = #tpu.pipeline_mode<synchronous>, transform_indices = @transform_9, window_bounds = array<i64: 1, 128>}, {pipeline_mode = #tpu.pipeline_mode<synchronous>, transform_indices = @transform_10, window_bounds = array<i64: 128, 32>}, {pipeline_mode = #tpu.pipeline_mode<synchronous>, transform_indices = @transform_11, window_bounds = array<i64: 1, 32>}, {pipeline_mode = #tpu.pipeline_mode<synchronous>, transform_indices = @transform_12, window_bounds = array<i64: 1, 32>}, {pipeline_mode = #tpu.pipeline_mode<synchronous>, transform_indices = @transform_13, window_bounds = array<i64: 1, 32>}, {transform_indices = @transform_14, window_bounds = array<i64: 2, 8, 32>}]} {
    %c0 = arith.constant 0 : index
    %c0_0 = arith.constant 0 : index
    %0 = vector.load %arg3[%c0, %c0_0] : memref<8x32xf32, #tpu.memory_space<vmem>>, vector<8x32xf32>
    %c0_1 = arith.constant 0 : index
    %c0_2 = arith.constant 0 : index
    %1 = vector.load %arg4[%c0_1, %c0_2] : memref<8x32xf32, #tpu.memory_space<vmem>>, vector<8x32xf32>
    %c0_3 = arith.constant 0 : index
    %c0_4 = arith.constant 0 : index
    %c0_5 = arith.constant 0 : index
    %2 = vector.load %arg5[%c0_3, %c0_4, %c0_5] : memref<8x32x32xf32, #tpu.memory_space<vmem>>, vector<8x32x32xf32>
    %c0_6 = arith.constant 0 : index
    %c0_7 = arith.constant 0 : index
    %c0_8 = arith.constant 0 : index
    %3 = vector.load %arg1[%c0_6, %c0_7, %c0_8] : memref<2x8x32xf32, #tpu.memory_space<vmem>>, vector<1x8x32xf32>
    %4 = vector.shape_cast %3 : vector<1x8x32xf32> to vector<8x32xf32>
    %c0_9 = arith.constant 0 : index
    %c0_10 = arith.constant 0 : index
    %c0_11 = arith.constant 0 : index
    %5 = vector.load %arg2[%c0_9, %c0_10, %c0_11] : memref<2x8x8xf32, #tpu.memory_space<vmem>>, vector<1x8x8xf32>
    %6 = vector.shape_cast %5 : vector<1x8x8xf32> to vector<8x8xf32>
    "tpu.trace_start"() <{level = 10 : i32, message = "hd,nd->hn"}> : () -> ()
    %cst = arith.constant dense<0.000000e+00> : vector<8x8xf32>
    %7 = tpu.matmul %0, %4, %cst {dimension_numbers = #tpu.dot_dimension_numbers<[1], [1], [0], [0], [0, 0, 1, 0], [], []>} : vector<8x32xf32>, vector<8x32xf32>, vector<8x8xf32> -> vector<8x8xf32>
    %cst_12 = arith.constant dense<0.000000e+00> : vector<8x8xf32>
    %8 = tpu.matmul %1, %4, %cst_12 {dimension_numbers = #tpu.dot_dimension_numbers<[1], [1], [0], [0], [0, 0, 1, 0], [], []>} : vector<8x32xf32>, vector<8x32xf32>, vector<8x8xf32> -> vector<8x8xf32>
    "tpu.trace_stop"() : () -> ()
    %9 = vector.shape_cast %7 : vector<8x8xf32> to vector<8x8x1xf32>
    %10 = vector.shape_cast %8 : vector<8x8xf32> to vector<8x1x8xf32>
    %11 = vector.broadcast %9 : vector<8x8x1xf32> to vector<8x8x8xf32>
    %12 = vector.broadcast %10 : vector<8x1x8xf32> to vector<8x8x8xf32>
    %13 = arith.addf %11, %12 : vector<8x8x8xf32>
    %cst_13 = arith.constant 0.000000e+00 : f32
    %14 = vector.broadcast %cst_13 : f32 to vector<8x8x8xf32>
    %15 = arith.cmpf oge, %13, %14 : vector<8x8x8xf32>
    %cst_14 = arith.constant 2.000000e-01 : f32
    %16 = vector.broadcast %cst_14 : f32 to vector<8x8x8xf32>
    %17 = arith.mulf %16, %13 : vector<8x8x8xf32>
    %18 = arith.select %15, %13, %17 : vector<8x8x8xi1>, vector<8x8x8xf32>
    %19 = vector.shape_cast %6 : vector<8x8xf32> to vector<1x8x8xf32>
    %20 = vector.broadcast %19 : vector<1x8x8xf32> to vector<8x8x8xf32>
    %21 = arith.addf %18, %20 : vector<8x8x8xf32>
    %cst_15 = arith.constant dense<0xFF800000> : vector<8x8xf32>
    %22 = vector.multi_reduction <maximumf>, %21, %cst_15 [2] : vector<8x8x8xf32> to vector<8x8xf32>
    %23 = vector.shape_cast %22 : vector<8x8xf32> to vector<8x8x1xf32>
    %24 = vector.broadcast %23 : vector<8x8x1xf32> to vector<8x8x8xf32>
    %25 = arith.subf %21, %24 : vector<8x8x8xf32>
    %26 = math.exp %25 : vector<8x8x8xf32>
    %cst_16 = arith.constant dense<0.000000e+00> : vector<8x8xf32>
    %27 = vector.multi_reduction <add>, %26, %cst_16 [2] : vector<8x8x8xf32> to vector<8x8xf32>
    %28 = vector.shape_cast %27 : vector<8x8xf32> to vector<8x8x1xf32>
    %29 = tpu.reciprocal %28 {approx = true} : vector<8x8x1xf32> -> vector<8x8x1xf32>
    %30 = vector.broadcast %29 : vector<8x8x1xf32> to vector<8x8x8xf32>
    %31 = arith.mulf %26, %30 : vector<8x8x8xf32>
    %32 = vector.shape_cast %31 : vector<8x8x8xf32> to vector<64x8xf32>
    %cst_17 = arith.constant dense<0.000000e+00> : vector<64x32xf32>
    %33 = tpu.matmul %32, %4, %cst_17 {dimension_numbers = #tpu.dot_dimension_numbers<[1], [0], [0], [1], [0, 0, 1, 1], [], []>} : vector<64x8xf32>, vector<8x32xf32>, vector<64x32xf32> -> vector<64x32xf32>
    %34 = vector.shape_cast %33 : vector<64x32xf32> to vector<8x8x32xf32>
    %cst_18 = arith.constant dense<0.000000e+00> : vector<8x8x32xf32>
    %35 = tpu.matmul %34, %2, %cst_18 {dimension_numbers = #tpu.dot_dimension_numbers<[2], [1], [1], [2], [0, 0, 0, 1, 1, 2], [0], [0]>} : vector<8x8x32xf32>, vector<8x32x32xf32>, vector<8x8x32xf32> -> vector<8x8x32xf32>
    %36 = vector.extract_strided_slice %35 {offsets = [0, 0, 0], sizes = [1, 8, 32], strides = [1, 1, 1]} : vector<8x8x32xf32> to vector<1x8x32xf32>
    %37 = vector.shape_cast %36 : vector<1x8x32xf32> to vector<8x32xf32>
    %38 = vector.extract_strided_slice %35 {offsets = [1, 0, 0], sizes = [1, 8, 32], strides = [1, 1, 1]} : vector<8x8x32xf32> to vector<1x8x32xf32>
    %39 = vector.shape_cast %38 : vector<1x8x32xf32> to vector<8x32xf32>
    %40 = arith.addf %37, %39 : vector<8x32xf32>
    %41 = vector.extract_strided_slice %35 {offsets = [2, 0, 0], sizes = [1, 8, 32], strides = [1, 1, 1]} : vector<8x8x32xf32> to vector<1x8x32xf32>
    %42 = vector.shape_cast %41 : vector<1x8x32xf32> to vector<8x32xf32>
    %43 = arith.addf %40, %42 : vector<8x32xf32>
    %44 = vector.extract_strided_slice %35 {offsets = [3, 0, 0], sizes = [1, 8, 32], strides = [1, 1, 1]} : vector<8x8x32xf32> to vector<1x8x32xf32>
    %45 = vector.shape_cast %44 : vector<1x8x32xf32> to vector<8x32xf32>
    %46 = arith.addf %43, %45 : vector<8x32xf32>
    %47 = vector.extract_strided_slice %35 {offsets = [4, 0, 0], sizes = [1, 8, 32], strides = [1, 1, 1]} : vector<8x8x32xf32> to vector<1x8x32xf32>
    %48 = vector.shape_cast %47 : vector<1x8x32xf32> to vector<8x32xf32>
    %49 = arith.addf %46, %48 : vector<8x32xf32>
    %50 = vector.extract_strided_slice %35 {offsets = [5, 0, 0], sizes = [1, 8, 32], strides = [1, 1, 1]} : vector<8x8x32xf32> to vector<1x8x32xf32>
    %51 = vector.shape_cast %50 : vector<1x8x32xf32> to vector<8x32xf32>
    %52 = arith.addf %49, %51 : vector<8x32xf32>
    %53 = vector.extract_strided_slice %35 {offsets = [6, 0, 0], sizes = [1, 8, 32], strides = [1, 1, 1]} : vector<8x8x32xf32> to vector<1x8x32xf32>
    %54 = vector.shape_cast %53 : vector<1x8x32xf32> to vector<8x32xf32>
    %55 = arith.addf %52, %54 : vector<8x32xf32>
    %56 = vector.extract_strided_slice %35 {offsets = [7, 0, 0], sizes = [1, 8, 32], strides = [1, 1, 1]} : vector<8x8x32xf32> to vector<1x8x32xf32>
    %57 = vector.shape_cast %56 : vector<1x8x32xf32> to vector<8x32xf32>
    %58 = arith.addf %55, %57 : vector<8x32xf32>
    %c1 = arith.constant 1 : index
    %c0_19 = arith.constant 0 : index
    %c0_20 = arith.constant 0 : index
    %59 = vector.load %arg1[%c1, %c0_19, %c0_20] : memref<2x8x32xf32, #tpu.memory_space<vmem>>, vector<1x8x32xf32>
    %60 = vector.shape_cast %59 : vector<1x8x32xf32> to vector<8x32xf32>
    %c1_21 = arith.constant 1 : index
    %c0_22 = arith.constant 0 : index
    %c0_23 = arith.constant 0 : index
    %61 = vector.load %arg2[%c1_21, %c0_22, %c0_23] : memref<2x8x8xf32, #tpu.memory_space<vmem>>, vector<1x8x8xf32>
    %62 = vector.shape_cast %61 : vector<1x8x8xf32> to vector<8x8xf32>
    "tpu.trace_start"() <{level = 10 : i32, message = "hd,nd->hn"}> : () -> ()
    %cst_24 = arith.constant dense<0.000000e+00> : vector<8x8xf32>
    %63 = tpu.matmul %0, %60, %cst_24 {dimension_numbers = #tpu.dot_dimension_numbers<[1], [1], [0], [0], [0, 0, 1, 0], [], []>} : vector<8x32xf32>, vector<8x32xf32>, vector<8x8xf32> -> vector<8x8xf32>
    %cst_25 = arith.constant dense<0.000000e+00> : vector<8x8xf32>
    %64 = tpu.matmul %1, %60, %cst_25 {dimension_numbers = #tpu.dot_dimension_numbers<[1], [1], [0], [0], [0, 0, 1, 0], [], []>} : vector<8x32xf32>, vector<8x32xf32>, vector<8x8xf32> -> vector<8x8xf32>
    "tpu.trace_stop"() : () -> ()
    %65 = vector.shape_cast %63 : vector<8x8xf32> to vector<8x8x1xf32>
    %66 = vector.shape_cast %64 : vector<8x8xf32> to vector<8x1x8xf32>
    %67 = vector.broadcast %65 : vector<8x8x1xf32> to vector<8x8x8xf32>
    %68 = vector.broadcast %66 : vector<8x1x8xf32> to vector<8x8x8xf32>
    %69 = arith.addf %67, %68 : vector<8x8x8xf32>
    %cst_26 = arith.constant 0.000000e+00 : f32
    %70 = vector.broadcast %cst_26 : f32 to vector<8x8x8xf32>
    %71 = arith.cmpf oge, %69, %70 : vector<8x8x8xf32>
    %cst_27 = arith.constant 2.000000e-01 : f32
    %72 = vector.broadcast %cst_27 : f32 to vector<8x8x8xf32>
    %73 = arith.mulf %72, %69 : vector<8x8x8xf32>
    %74 = arith.select %71, %69, %73 : vector<8x8x8xi1>, vector<8x8x8xf32>
    %75 = vector.shape_cast %62 : vector<8x8xf32> to vector<1x8x8xf32>
    %76 = vector.broadcast %75 : vector<1x8x8xf32> to vector<8x8x8xf32>
    %77 = arith.addf %74, %76 : vector<8x8x8xf32>
    %cst_28 = arith.constant dense<0xFF800000> : vector<8x8xf32>
    %78 = vector.multi_reduction <maximumf>, %77, %cst_28 [2] : vector<8x8x8xf32> to vector<8x8xf32>
    %79 = vector.shape_cast %78 : vector<8x8xf32> to vector<8x8x1xf32>
    %80 = vector.broadcast %79 : vector<8x8x1xf32> to vector<8x8x8xf32>
    %81 = arith.subf %77, %80 : vector<8x8x8xf32>
    %82 = math.exp %81 : vector<8x8x8xf32>
    %cst_29 = arith.constant dense<0.000000e+00> : vector<8x8xf32>
    %83 = vector.multi_reduction <add>, %82, %cst_29 [2] : vector<8x8x8xf32> to vector<8x8xf32>
    %84 = vector.shape_cast %83 : vector<8x8xf32> to vector<8x8x1xf32>
    %85 = tpu.reciprocal %84 {approx = true} : vector<8x8x1xf32> -> vector<8x8x1xf32>
    %86 = vector.broadcast %85 : vector<8x8x1xf32> to vector<8x8x8xf32>
    %87 = arith.mulf %82, %86 : vector<8x8x8xf32>
    %88 = vector.shape_cast %87 : vector<8x8x8xf32> to vector<64x8xf32>
    %cst_30 = arith.constant dense<0.000000e+00> : vector<64x32xf32>
    %89 = tpu.matmul %88, %60, %cst_30 {dimension_numbers = #tpu.dot_dimension_numbers<[1], [0], [0], [1], [0, 0, 1, 1], [], []>} : vector<64x8xf32>, vector<8x32xf32>, vector<64x32xf32> -> vector<64x32xf32>
    %90 = vector.shape_cast %89 : vector<64x32xf32> to vector<8x8x32xf32>
    %cst_31 = arith.constant dense<0.000000e+00> : vector<8x8x32xf32>
    %91 = tpu.matmul %90, %2, %cst_31 {dimension_numbers = #tpu.dot_dimension_numbers<[2], [1], [1], [2], [0, 0, 0, 1, 1, 2], [0], [0]>} : vector<8x8x32xf32>, vector<8x32x32xf32>, vector<8x8x32xf32> -> vector<8x8x32xf32>
    %92 = vector.extract_strided_slice %91 {offsets = [0, 0, 0], sizes = [1, 8, 32], strides = [1, 1, 1]} : vector<8x8x32xf32> to vector<1x8x32xf32>
    %93 = vector.shape_cast %92 : vector<1x8x32xf32> to vector<8x32xf32>
    %94 = vector.extract_strided_slice %91 {offsets = [1, 0, 0], sizes = [1, 8, 32], strides = [1, 1, 1]} : vector<8x8x32xf32> to vector<1x8x32xf32>
    %95 = vector.shape_cast %94 : vector<1x8x32xf32> to vector<8x32xf32>
    %96 = arith.addf %93, %95 : vector<8x32xf32>
    %97 = vector.extract_strided_slice %91 {offsets = [2, 0, 0], sizes = [1, 8, 32], strides = [1, 1, 1]} : vector<8x8x32xf32> to vector<1x8x32xf32>
    %98 = vector.shape_cast %97 : vector<1x8x32xf32> to vector<8x32xf32>
    %99 = arith.addf %96, %98 : vector<8x32xf32>
    %100 = vector.extract_strided_slice %91 {offsets = [3, 0, 0], sizes = [1, 8, 32], strides = [1, 1, 1]} : vector<8x8x32xf32> to vector<1x8x32xf32>
    %101 = vector.shape_cast %100 : vector<1x8x32xf32> to vector<8x32xf32>
    %102 = arith.addf %99, %101 : vector<8x32xf32>
    %103 = vector.extract_strided_slice %91 {offsets = [4, 0, 0], sizes = [1, 8, 32], strides = [1, 1, 1]} : vector<8x8x32xf32> to vector<1x8x32xf32>
    %104 = vector.shape_cast %103 : vector<1x8x32xf32> to vector<8x32xf32>
    %105 = arith.addf %102, %104 : vector<8x32xf32>
    %106 = vector.extract_strided_slice %91 {offsets = [5, 0, 0], sizes = [1, 8, 32], strides = [1, 1, 1]} : vector<8x8x32xf32> to vector<1x8x32xf32>
    %107 = vector.shape_cast %106 : vector<1x8x32xf32> to vector<8x32xf32>
    %108 = arith.addf %105, %107 : vector<8x32xf32>
    %109 = vector.extract_strided_slice %91 {offsets = [6, 0, 0], sizes = [1, 8, 32], strides = [1, 1, 1]} : vector<8x8x32xf32> to vector<1x8x32xf32>
    %110 = vector.shape_cast %109 : vector<1x8x32xf32> to vector<8x32xf32>
    %111 = arith.addf %108, %110 : vector<8x32xf32>
    %112 = vector.extract_strided_slice %91 {offsets = [7, 0, 0], sizes = [1, 8, 32], strides = [1, 1, 1]} : vector<8x8x32xf32> to vector<1x8x32xf32>
    %113 = vector.shape_cast %112 : vector<1x8x32xf32> to vector<8x32xf32>
    %114 = arith.addf %111, %113 : vector<8x32xf32>
    %115 = tpu.concatenate %58, %114 in 0 : vector<8x32xf32>, vector<8x32xf32> -> vector<16x32xf32>
    %c0_32 = arith.constant 0 : index
    %c0_33 = arith.constant 0 : index
    %116 = vector.load %arg6[%c0_32, %c0_33] : memref<1x32xf32, #tpu.memory_space<vmem>>, vector<1x32xf32>
    %117 = vector.broadcast %116 : vector<1x32xf32> to vector<16x32xf32>
    %118 = arith.addf %115, %117 : vector<16x32xf32>
    %c0_34 = arith.constant 0 : index
    %c0_35 = arith.constant 0 : index
    %c0_36 = arith.constant 0 : index
    %119 = vector.load %arg1[%c0_34, %c0_35, %c0_36] : memref<2x8x32xf32, #tpu.memory_space<vmem>>, vector<2x8x32xf32>
    %120 = vector.shape_cast %119 : vector<2x8x32xf32> to vector<16x32xf32>
    %121 = arith.addf %118, %120 : vector<16x32xf32>
    %cst_37 = arith.constant dense<0.000000e+00> : vector<16xf32>
    %122 = vector.multi_reduction <add>, %121, %cst_37 [1] : vector<16x32xf32> to vector<16xf32>
    %123 = vector.shape_cast %122 : vector<16xf32> to vector<16x1xf32>
    %cst_38 = arith.constant 3.200000e+01 : f32
    %124 = vector.broadcast %cst_38 : f32 to vector<16x1xf32>
    %125 = arith.divf %123, %124 : vector<16x1xf32>
    %126 = vector.broadcast %125 : vector<16x1xf32> to vector<16x32xf32>
    %127 = arith.subf %121, %126 : vector<16x32xf32>
    %128 = arith.mulf %127, %127 : vector<16x32xf32>
    %cst_39 = arith.constant dense<0.000000e+00> : vector<16xf32>
    %129 = vector.multi_reduction <add>, %128, %cst_39 [1] : vector<16x32xf32> to vector<16xf32>
    %130 = vector.shape_cast %129 : vector<16xf32> to vector<16x1xf32>
    %cst_40 = arith.constant 3.200000e+01 : f32
    %131 = vector.broadcast %cst_40 : f32 to vector<16x1xf32>
    %132 = arith.divf %130, %131 : vector<16x1xf32>
    %133 = vector.broadcast %125 : vector<16x1xf32> to vector<16x32xf32>
    %134 = arith.subf %121, %133 : vector<16x32xf32>
    %cst_41 = arith.constant 9.99999974E-6 : f32
    %135 = vector.broadcast %cst_41 : f32 to vector<16x1xf32>
    %136 = arith.addf %132, %135 : vector<16x1xf32>
    %137 = math.rsqrt %136 : vector<16x1xf32>
    %138 = vector.broadcast %137 : vector<16x1xf32> to vector<16x32xf32>
    %139 = arith.mulf %134, %138 : vector<16x32xf32>
    %c0_42 = arith.constant 0 : index
    %c0_43 = arith.constant 0 : index
    %140 = vector.load %arg7[%c0_42, %c0_43] : memref<1x32xf32, #tpu.memory_space<vmem>>, vector<1x32xf32>
    %141 = vector.broadcast %140 : vector<1x32xf32> to vector<16x32xf32>
    %142 = arith.mulf %139, %141 : vector<16x32xf32>
    %c0_44 = arith.constant 0 : index
    %c0_45 = arith.constant 0 : index
    %143 = vector.load %arg8[%c0_44, %c0_45] : memref<1x32xf32, #tpu.memory_space<vmem>>, vector<1x32xf32>
    %144 = vector.broadcast %143 : vector<1x32xf32> to vector<16x32xf32>
    %145 = arith.addf %142, %144 : vector<16x32xf32>
    %c0_46 = arith.constant 0 : index
    %c0_47 = arith.constant 0 : index
    %146 = vector.load %arg9[%c0_46, %c0_47] : memref<32x128xf32, #tpu.memory_space<vmem>>, vector<32x128xf32>
    %cst_48 = arith.constant dense<0.000000e+00> : vector<16x128xf32>
    %147 = tpu.matmul %145, %146, %cst_48 {dimension_numbers = #tpu.dot_dimension_numbers<[1], [0], [0], [1], [0, 0, 1, 1], [], []>} : vector<16x32xf32>, vector<32x128xf32>, vector<16x128xf32> -> vector<16x128xf32>
    %c0_49 = arith.constant 0 : index
    %c0_50 = arith.constant 0 : index
    %148 = vector.load %arg10[%c0_49, %c0_50] : memref<1x128xf32, #tpu.memory_space<vmem>>, vector<1x128xf32>
    %149 = vector.broadcast %148 : vector<1x128xf32> to vector<16x128xf32>
    %150 = arith.addf %147, %149 : vector<16x128xf32>
    %cst_51 = arith.constant 0.000000e+00 : f32
    %151 = vector.broadcast %cst_51 : f32 to vector<16x128xf32>
    %152 = arith.maximumf %150, %151 : vector<16x128xf32>
    %c0_52 = arith.constant 0 : index
    %c0_53 = arith.constant 0 : index
    %153 = vector.load %arg11[%c0_52, %c0_53] : memref<128x32xf32, #tpu.memory_space<vmem>>, vector<128x32xf32>
    %cst_54 = arith.constant dense<0.000000e+00> : vector<16x32xf32>
    %154 = tpu.matmul %152, %153, %cst_54 {dimension_numbers = #tpu.dot_dimension_numbers<[1], [0], [0], [1], [0, 0, 1, 1], [], []>} : vector<16x128xf32>, vector<128x32xf32>, vector<16x32xf32> -> vector<16x32xf32>
    %c0_55 = arith.constant 0 : index
    %c0_56 = arith.constant 0 : index
    %155 = vector.load %arg12[%c0_55, %c0_56] : memref<1x32xf32, #tpu.memory_space<vmem>>, vector<1x32xf32>
    %156 = vector.broadcast %155 : vector<1x32xf32> to vector<16x32xf32>
    %157 = arith.addf %154, %156 : vector<16x32xf32>
    %158 = arith.addf %157, %145 : vector<16x32xf32>
    %cst_57 = arith.constant dense<0.000000e+00> : vector<16xf32>
    %159 = vector.multi_reduction <add>, %158, %cst_57 [1] : vector<16x32xf32> to vector<16xf32>
    %160 = vector.shape_cast %159 : vector<16xf32> to vector<16x1xf32>
    %cst_58 = arith.constant 3.200000e+01 : f32
    %161 = vector.broadcast %cst_58 : f32 to vector<16x1xf32>
    %162 = arith.divf %160, %161 : vector<16x1xf32>
    %163 = vector.broadcast %162 : vector<16x1xf32> to vector<16x32xf32>
    %164 = arith.subf %158, %163 : vector<16x32xf32>
    %165 = arith.mulf %164, %164 : vector<16x32xf32>
    %cst_59 = arith.constant dense<0.000000e+00> : vector<16xf32>
    %166 = vector.multi_reduction <add>, %165, %cst_59 [1] : vector<16x32xf32> to vector<16xf32>
    %167 = vector.shape_cast %166 : vector<16xf32> to vector<16x1xf32>
    %cst_60 = arith.constant 3.200000e+01 : f32
    %168 = vector.broadcast %cst_60 : f32 to vector<16x1xf32>
    %169 = arith.divf %167, %168 : vector<16x1xf32>
    %170 = vector.broadcast %162 : vector<16x1xf32> to vector<16x32xf32>
    %171 = arith.subf %158, %170 : vector<16x32xf32>
    %cst_61 = arith.constant 9.99999974E-6 : f32
    %172 = vector.broadcast %cst_61 : f32 to vector<16x1xf32>
    %173 = arith.addf %169, %172 : vector<16x1xf32>
    %174 = math.rsqrt %173 : vector<16x1xf32>
    %175 = vector.broadcast %174 : vector<16x1xf32> to vector<16x32xf32>
    %176 = arith.mulf %171, %175 : vector<16x32xf32>
    %c0_62 = arith.constant 0 : index
    %c0_63 = arith.constant 0 : index
    %177 = vector.load %arg13[%c0_62, %c0_63] : memref<1x32xf32, #tpu.memory_space<vmem>>, vector<1x32xf32>
    %178 = vector.broadcast %177 : vector<1x32xf32> to vector<16x32xf32>
    %179 = arith.mulf %176, %178 : vector<16x32xf32>
    %c0_64 = arith.constant 0 : index
    %c0_65 = arith.constant 0 : index
    %180 = vector.load %arg14[%c0_64, %c0_65] : memref<1x32xf32, #tpu.memory_space<vmem>>, vector<1x32xf32>
    %181 = vector.broadcast %180 : vector<1x32xf32> to vector<16x32xf32>
    %182 = arith.addf %179, %181 : vector<16x32xf32>
    %183 = vector.shape_cast %182 : vector<16x32xf32> to vector<2x8x32xf32>
    %c0_66 = arith.constant 0 : index
    %c0_67 = arith.constant 0 : index
    %c0_68 = arith.constant 0 : index
    %184 = vector.load %arg15[%c0_66, %c0_67, %c0_68] : memref<2x8x32xf32, #tpu.memory_space<vmem>>, vector<2x8x32xf32>
    tpu.vector_store %arg15[%c0_66, %c0_67, %c0_68], %183 {strides = array<i32>} : memref<2x8x32xf32, #tpu.memory_space<vmem>>, vector<2x8x32xf32>,
    return
  }
  func.func @transform_0(%arg0: i32) -> (i32, i32, i32) {
    %c0_i32 = arith.constant 0 : i32
    %c0_i32_0 = arith.constant 0 : i32
    %c0_i32_1 = arith.constant 0 : i32
    return %arg0, %c0_i32, %c0_i32_0 : i32, i32, i32
  }
  func.func @transform_1(%arg0: i32) -> (i32, i32, i32) {
    %c0_i32 = arith.constant 0 : i32
    %c0_i32_0 = arith.constant 0 : i32
    %c0_i32_1 = arith.constant 0 : i32
    return %arg0, %c0_i32, %c0_i32_0 : i32, i32, i32
  }
  func.func @transform_2(%arg0: i32) -> (i32, i32) {
    %c0_i32 = arith.constant 0 : i32
    %c0_i32_0 = arith.constant 0 : i32
    %c0_i32_1 = arith.constant 0 : i32
    return %c0_i32, %c0_i32_0 : i32, i32
  }
  func.func @transform_3(%arg0: i32) -> (i32, i32) {
    %c0_i32 = arith.constant 0 : i32
    %c0_i32_0 = arith.constant 0 : i32
    %c0_i32_1 = arith.constant 0 : i32
    return %c0_i32, %c0_i32_0 : i32, i32
  }
  func.func @transform_4(%arg0: i32) -> (i32, i32, i32) {
    %c0_i32 = arith.constant 0 : i32
    %c0_i32_0 = arith.constant 0 : i32
    %c0_i32_1 = arith.constant 0 : i32
    %c0_i32_2 = arith.constant 0 : i32
    return %c0_i32, %c0_i32_0, %c0_i32_1 : i32, i32, i32
  }
  func.func @transform_5(%arg0: i32) -> (i32, i32) {
    %c0_i32 = arith.constant 0 : i32
    %c0_i32_0 = arith.constant 0 : i32
    %c0_i32_1 = arith.constant 0 : i32
    return %c0_i32, %c0_i32_0 : i32, i32
  }
  func.func @transform_6(%arg0: i32) -> (i32, i32) {
    %c0_i32 = arith.constant 0 : i32
    %c0_i32_0 = arith.constant 0 : i32
    %c0_i32_1 = arith.constant 0 : i32
    return %c0_i32, %c0_i32_0 : i32, i32
  }
  func.func @transform_7(%arg0: i32) -> (i32, i32) {
    %c0_i32 = arith.constant 0 : i32
    %c0_i32_0 = arith.constant 0 : i32
    %c0_i32_1 = arith.constant 0 : i32
    return %c0_i32, %c0_i32_0 : i32, i32
  }
  func.func @transform_8(%arg0: i32) -> (i32, i32) {
    %c0_i32 = arith.constant 0 : i32
    %c0_i32_0 = arith.constant 0 : i32
    %c0_i32_1 = arith.constant 0 : i32
    return %c0_i32, %c0_i32_0 : i32, i32
  }
  func.func @transform_9(%arg0: i32) -> (i32, i32) {
    %c0_i32 = arith.constant 0 : i32
    %c0_i32_0 = arith.constant 0 : i32
    %c0_i32_1 = arith.constant 0 : i32
    return %c0_i32, %c0_i32_0 : i32, i32
  }
  func.func @transform_10(%arg0: i32) -> (i32, i32) {
    %c0_i32 = arith.constant 0 : i32
    %c0_i32_0 = arith.constant 0 : i32
    %c0_i32_1 = arith.constant 0 : i32
    return %c0_i32, %c0_i32_0 : i32, i32
  }
  func.func @transform_11(%arg0: i32) -> (i32, i32) {
    %c0_i32 = arith.constant 0 : i32
    %c0_i32_0 = arith.constant 0 : i32
    %c0_i32_1 = arith.constant 0 : i32
    return %c0_i32, %c0_i32_0 : i32, i32
  }
  func.func @transform_12(%arg0: i32) -> (i32, i32) {
    %c0_i32 = arith.constant 0 : i32
    %c0_i32_0 = arith.constant 0 : i32
    %c0_i32_1 = arith.constant 0 : i32
    return %c0_i32, %c0_i32_0 : i32, i32
  }
  func.func @transform_13(%arg0: i32) -> (i32, i32) {
    %c0_i32 = arith.constant 0 : i32
    %c0_i32_0 = arith.constant 0 : i32
    %c0_i32_1 = arith.constant 0 : i32
    return %c0_i32, %c0_i32_0 : i32, i32
  }
  func.func @transform_14(%arg0: i32) -> (i32, i32, i32) {
    %c0_i32 = arith.constant 0 : i32
    %c0_i32_0 = arith.constant 0 : i32
    %c0_i32_1 = arith.constant 0 : i32
    return %arg0, %c0_i32, %c0_i32_0 : i32, i32, i32
  }
}

</mosaic_0001>

<llo_original>
// kernel: tpu_custom_call.1
$region0: #{tpu_custom_call.1}
  #allocation0 [shape = 'u32[]', space=smem, size = 0x4, offset = 0x4, fixed_abs, tag = 'smem constant byte address 0x4 - core index']
  #allocation1 [shape = 'u32[72,128]{1,0:T(1,128)}', space=vmem, size = 0x9000, scoped, tag = 'internal scratch']
  %s0 = inlined_call_operand.vmem [shape: f32[4,8,32], index: 0, kind: input, shape index: {}]
  %s1 = inlined_call_operand.vmem [shape: f32[4,8,8], index: 1, kind: input, shape index: {}]
  %s2 = inlined_call_operand.vmem [shape: f32[8,32], index: 2, kind: input, shape index: {}]
  %s3 = inlined_call_operand.vmem [shape: f32[8,32], index: 3, kind: input, shape index: {}]
  %s4 = inlined_call_operand.hbm [shape: f32[8,32,32], index: 4, kind: input, shape index: {}]
  %s5 = inlined_call_operand.vmem [shape: f32[1,32], index: 5, kind: input, shape index: {}]
  %s6 = inlined_call_operand.vmem [shape: f32[1,32], index: 6, kind: input, shape index: {}]
  %s7 = inlined_call_operand.vmem [shape: f32[1,32], index: 7, kind: input, shape index: {}]
  %s8 = inlined_call_operand.vmem [shape: f32[32,128], index: 8, kind: input, shape index: {}]
  %s9 = inlined_call_operand.vmem [shape: f32[1,128], index: 9, kind: input, shape index: {}]
  %s10 = inlined_call_operand.vmem [shape: f32[128,32], index: 10, kind: input, shape index: {}]
  %s11 = inlined_call_operand.vmem [shape: f32[1,32], index: 11, kind: input, shape index: {}]
  %s12 = inlined_call_operand.vmem [shape: f32[1,32], index: 12, kind: input, shape index: {}]
  %s13 = inlined_call_operand.vmem [shape: f32[1,32], index: 13, kind: input, shape index: {}]
  %s14 = inlined_call_operand.hbm [shape: f32[4,8,32], index: 14, kind: output, shape index: {}]
  %s15 = sld [smem:[#allocation0]]
  $region93: #{tpu_custom_call.1} parent=0
    _
  %s17 = ssub.s32 1, %s15
  %s18 = scalar_select 0, %s17, %s15
  $region1: #{tpu_custom_call.1} parent=0
    #allocation2 [shape = 'u8[131072]{0}', space=vmem, size = 0x20000, scoped, tag = 'input window, operand 4, single buffered']
    #allocation3 [shape = 's32[2]{0}', space=sflag, size = 0x8, scoped, tag = 'scoped memory for tpu_custom_call.1']
    #allocation4 [shape = 's32[2]{0}', space=sflag, size = 0x8, scoped, tag = 'scoped memory for tpu_custom_call.1']
    #allocation5 [shape = 'u8[16384]{0}', space=vmem, size = 0x4000, scoped, tag = 'output window, operand 0']
    %19 = vsyncpa [#allocation3], 0
    %20 = vsyncpa [#allocation4], 0
    %s21 = scalar_lea.sflag [#allocation4], 1
    %22 = vsyncpa %s21, 0
    loop: start=0, step=1, limit=4
    $region2: #{tpu_custom_call.1} parent=1 // loop_pre_header
      _
    $region3: #{tpu_custom_call.1} parent=1 // loop_header
      %s24 = sphi 0, %s28
      %p25 = scmp.ge.s32.totalorder %s24, 4
      %s34 = sphi 0, %s36
      %s37 = sphi 0, %s34
      %s38 = sphi 0, %s37
      %s54 = sphi 0, %s38
      %s60 = sphi 0, %s62
      %s63 = sphi 0, %s60
      %s64 = sphi 0, %s63
      %s80 = sphi 0, %s64
      %s84 = sphi 0, %s84
      %s86 = sphi 0, %s84
      %s87 = sphi 0, %s86
      %s101 = sphi 0, %s87
      %s105 = sphi 0, %s105
      %s107 = sphi 0, %s105
      %s108 = sphi 0, %s107
      %s122 = sphi 0, %s108
      %s126 = sphi 0, %s126
      %s128 = sphi 0, %s126
      %s129 = sphi 0, %s128
      %s143 = sphi 0, %s129
      %s147 = sphi 0, %s147
      %s149 = sphi 0, %s147
      %s150 = sphi 0, %s149
      %s164 = sphi 0, %s150
      %s168 = sphi 0, %s168
      %s170 = sphi 0, %s168
      %s171 = sphi 0, %s170
      %s185 = sphi 0, %s171
      %s189 = sphi 0, %s189
      %s191 = sphi 0, %s189
      %s192 = sphi 0, %s191
      %s206 = sphi 0, %s192
      %s210 = sphi 0, %s210
      %s212 = sphi 0, %s210
      %s213 = sphi 0, %s212
      %s227 = sphi 0, %s213
      %s231 = sphi 0, %s231
      %s233 = sphi 0, %s231
      %s234 = sphi 0, %s233
      %s248 = sphi 0, %s234
      %s252 = sphi 0, %s252
      %s254 = sphi 0, %s252
      %s255 = sphi 0, %s254
      %s269 = sphi 0, %s255
      %s273 = sphi 0, %s273
      %s275 = sphi 0, %s273
      %s276 = sphi 0, %s275
      %s290 = sphi 0, %s276
      %s294 = sphi 0, %s294
      %s296 = sphi 0, %s294
      %s297 = sphi 0, %s296
      %s311 = sphi 0, %s297
      %s315 = sphi 0, %s315
      %s317 = sphi 0, %s315
      %s318 = sphi 0, %s317
      %s332 = sphi 0, %s318
      %s338 = sphi 0, %s340
      %s341 = sphi 0, %s338
      %s342 = sphi 0, %s341
      %s358 = sphi 0, %s342
    $region4: #{tpu_custom_call.1} parent=1 // loop_header_branch
      %27 = sbr.rel (%p25) target = $region8
    $region5: #{tpu_custom_call.1} parent=1 // loop_body
      %s29 = ssub.s32 %s24, 1
      %s30 = ssub.s32 %s24, 2
      %s31 = sadd.s32 %s24, 1
      %s32 = ssub.s32 %s24, %s31
      %p33 = scmp.eq.s32.totalorder %s32, 0
      %s35 = sadd.s32 %s34, 1
      %s36 = scalar_select %p33, %s34, %s35
      %p39 = pneg %p33
      %p40 = scmp.eq.s32.totalorder %s24, 1
      %p41 = por %p39, %p40
      %p42 = scmp.ne.s32.totalorder %s34, %s37
      %p43 = scmp.eq.s32.totalorder %s24, 0
      %p44 = por %p42, %p43
      %p45 = scmp.ne.s32.totalorder %s34, %s37
      %p46 = scmp.eq.s32.totalorder %s29, 1
      %p47 = por %p45, %p46
      %p48 = scmp.ne.s32.totalorder %s37, %s38
      %p49 = scmp.eq.s32.totalorder %s29, 0
      %p50 = por %p48, %p49
      %p51 = scmp.ne.s32.totalorder %s37, %s38
      %p52 = scmp.eq.s32.totalorder %s30, 1
      %p53 = por %p51, %p52
      %p55 = scmp.ne.s32.totalorder %s38, %s54
      %p56 = scmp.eq.s32.totalorder %s30, 0
      %p57 = por %p55, %p56
      %s58 = ssub.s32 %s24, %s31
      %p59 = scmp.eq.s32.totalorder %s58, 0
      %s61 = sadd.s32 %s60, 1
      %s62 = scalar_select %p59, %s60, %s61
      %p65 = pneg %p59
      %p66 = scmp.eq.s32.totalorder %s24, 1
      %p67 = por %p65, %p66
      %p68 = scmp.ne.s32.totalorder %s60, %s63
      %p69 = scmp.eq.s32.totalorder %s24, 0
      %p70 = por %p68, %p69
      %p71 = scmp.ne.s32.totalorder %s60, %s63
      %p72 = scmp.eq.s32.totalorder %s29, 1
      %p73 = por %p71, %p72
      %p74 = scmp.ne.s32.totalorder %s63, %s64
      %p75 = scmp.eq.s32.totalorder %s29, 0
      %p76 = por %p74, %p75
      %p77 = scmp.ne.s32.totalorder %s63, %s64
      %p78 = scmp.eq.s32.totalorder %s30, 1
      %p79 = por %p77, %p78
      %p81 = scmp.ne.s32.totalorder %s64, %s80
      %p82 = scmp.eq.s32.totalorder %s30, 0
      %p83 = por %p81, %p82
      %s85 = sadd.s32 %s84, 1
      %p88 = scmp.eq.s32.totalorder %s24, 1
      %p89 = scmp.ne.s32.totalorder %s84, %s86
      %p90 = scmp.eq.s32.totalorder %s24, 0
      %p91 = por %p89, %p90
      %p92 = scmp.ne.s32.totalorder %s84, %s86
      %p93 = scmp.eq.s32.totalorder %s29, 1
      %p94 = por %p92, %p93
      %p95 = scmp.ne.s32.totalorder %s86, %s87
      %p96 = scmp.eq.s32.totalorder %s29, 0
      %p97 = por %p95, %p96
      %p98 = scmp.ne.s32.totalorder %s86, %s87
      %p99 = scmp.eq.s32.totalorder %s30, 1
      %p100 = por %p98, %p99
      %p102 = scmp.ne.s32.totalorder %s87, %s101
      %p103 = scmp.eq.s32.totalorder %s30, 0
      %p104 = por %p102, %p103
      %s106 = sadd.s32 %s105, 1
      %p109 = scmp.eq.s32.totalorder %s24, 1
      %p110 = scmp.ne.s32.totalorder %s105, %s107
      %p111 = scmp.eq.s32.totalorder %s24, 0
      %p112 = por %p110, %p111
      %p113 = scmp.ne.s32.totalorder %s105, %s107
      %p114 = scmp.eq.s32.totalorder %s29, 1
      %p115 = por %p113, %p114
      %p116 = scmp.ne.s32.totalorder %s107, %s108
      %p117 = scmp.eq.s32.totalorder %s29, 0
      %p118 = por %p116, %p117
      %p119 = scmp.ne.s32.totalorder %s107, %s108
      %p120 = scmp.eq.s32.totalorder %s30, 1
      %p121 = por %p119, %p120
      %p123 = scmp.ne.s32.totalorder %s108, %s122
      %p124 = scmp.eq.s32.totalorder %s30, 0
      %p125 = por %p123, %p124
      %s127 = sadd.s32 %s126, 1
      %p130 = scmp.eq.s32.totalorder %s24, 1
      %p131 = scmp.ne.s32.totalorder %s126, %s128
      %p132 = scmp.eq.s32.totalorder %s24, 0
      %p133 = por %p131, %p132
      %p134 = scmp.ne.s32.totalorder %s126, %s128
      %p135 = scmp.eq.s32.totalorder %s29, 1
      %p136 = por %p134, %p135
      %p137 = scmp.ne.s32.totalorder %s128, %s129
      %p138 = scmp.eq.s32.totalorder %s29, 0
      %p139 = por %p137, %p138
      %p140 = scmp.ne.s32.totalorder %s128, %s129
      %p141 = scmp.eq.s32.totalorder %s30, 1
      %p142 = por %p140, %p141
      %p144 = scmp.ne.s32.totalorder %s129, %s143
      %p145 = scmp.eq.s32.totalorder %s30, 0
      %p146 = por %p144, %p145
      %s148 = sadd.s32 %s147, 1
      %p151 = scmp.eq.s32.totalorder %s24, 1
      %p152 = scmp.ne.s32.totalorder %s147, %s149
      %p153 = scmp.eq.s32.totalorder %s24, 0
      %p154 = por %p152, %p153
      %p155 = scmp.ne.s32.totalorder %s147, %s149
      %p156 = scmp.eq.s32.totalorder %s29, 1
      %p157 = por %p155, %p156
      %p158 = scmp.ne.s32.totalorder %s149, %s150
      %p159 = scmp.eq.s32.totalorder %s29, 0
      %p160 = por %p158, %p159
      %p161 = scmp.ne.s32.totalorder %s149, %s150
      %p162 = scmp.eq.s32.totalorder %s30, 1
      %p163 = por %p161, %p162
      %p165 = scmp.ne.s32.totalorder %s150, %s164
      %p166 = scmp.eq.s32.totalorder %s30, 0
      %p167 = por %p165, %p166
      %s169 = sadd.s32 %s168, 1
      %p172 = scmp.eq.s32.totalorder %s24, 1
      %p173 = scmp.ne.s32.totalorder %s168, %s170
      %p174 = scmp.eq.s32.totalorder %s24, 0
      %p175 = por %p173, %p174
      %p176 = scmp.ne.s32.totalorder %s168, %s170
      %p177 = scmp.eq.s32.totalorder %s29, 1
      %p178 = por %p176, %p177
      %p179 = scmp.ne.s32.totalorder %s170, %s171
      %p180 = scmp.eq.s32.totalorder %s29, 0
      %p181 = por %p179, %p180
      %p182 = scmp.ne.s32.totalorder %s170, %s171
      %p183 = scmp.eq.s32.totalorder %s30, 1
      %p184 = por %p182, %p183
      %p186 = scmp.ne.s32.totalorder %s171, %s185
      %p187 = scmp.eq.s32.totalorder %s30, 0
      %p188 = por %p186, %p187
      %s190 = sadd.s32 %s189, 1
      %p193 = scmp.eq.s32.totalorder %s24, 1
      %p194 = scmp.ne.s32.totalorder %s189, %s191
      %p195 = scmp.eq.s32.totalorder %s24, 0
      %p196 = por %p194, %p195
      %p197 = scmp.ne.s32.totalorder %s189, %s191
      %p198 = scmp.eq.s32.totalorder %s29, 1
      %p199 = por %p197, %p198
      %p200 = scmp.ne.s32.totalorder %s191, %s192
      %p201 = scmp.eq.s32.totalorder %s29, 0
      %p202 = por %p200, %p201
      %p203 = scmp.ne.s32.totalorder %s191, %s192
      %p204 = scmp.eq.s32.totalorder %s30, 1
      %p205 = por %p203, %p204
      %p207 = scmp.ne.s32.totalorder %s192, %s206
      %p208 = scmp.eq.s32.totalorder %s30, 0
      %p209 = por %p207, %p208
      %s211 = sadd.s32 %s210, 1
      %p214 = scmp.eq.s32.totalorder %s24, 1
      %p215 = scmp.ne.s32.totalorder %s210, %s212
      %p216 = scmp.eq.s32.totalorder %s24, 0
      %p217 = por %p215, %p216
      %p218 = scmp.ne.s32.totalorder %s210, %s212
      %p219 = scmp.eq.s32.totalorder %s29, 1
      %p220 = por %p218, %p219
      %p221 = scmp.ne.s32.totalorder %s212, %s213
      %p222 = scmp.eq.s32.totalorder %s29, 0
      %p223 = por %p221, %p222
      %p224 = scmp.ne.s32.totalorder %s212, %s213
      %p225 = scmp.eq.s32.totalorder %s30, 1
      %p226 = por %p224, %p225
      %p228 = scmp.ne.s32.totalorder %s213, %s227
      %p229 = scmp.eq.s32.totalorder %s30, 0
      %p230 = por %p228, %p229
      %s232 = sadd.s32 %s231, 1
      %p235 = scmp.eq.s32.totalorder %s24, 1
      %p236 = scmp.ne.s32.totalorder %s231, %s233
      %p237 = scmp.eq.s32.totalorder %s24, 0
      %p238 = por %p236, %p237
      %p239 = scmp.ne.s32.totalorder %s231, %s233
      %p240 = scmp.eq.s32.totalorder %s29, 1
      %p241 = por %p239, %p240
      %p242 = scmp.ne.s32.totalorder %s233, %s234
      %p243 = scmp.eq.s32.totalorder %s29, 0
      %p244 = por %p242, %p243
      %p245 = scmp.ne.s32.totalorder %s233, %s234
      %p246 = scmp.eq.s32.totalorder %s30, 1
      %p247 = por %p245, %p246
      %p249 = scmp.ne.s32.totalorder %s234, %s248
      %p250 = scmp.eq.s32.totalorder %s30, 0
      %p251 = por %p249, %p250
      %s253 = sadd.s32 %s252, 1
      %p256 = scmp.eq.s32.totalorder %s24, 1
      %p257 = scmp.ne.s32.totalorder %s252, %s254
      %p258 = scmp.eq.s32.totalorder %s24, 0
      %p259 = por %p257, %p258
      %p260 = scmp.ne.s32.totalorder %s252, %s254
      %p261 = scmp.eq.s32.totalorder %s29, 1
      %p262 = por %p260, %p261
      %p263 = scmp.ne.s32.totalorder %s254, %s255
      %p264 = scmp.eq.s32.totalorder %s29, 0
      %p265 = por %p263, %p264
      %p266 = scmp.ne.s32.totalorder %s254, %s255
      %p267 = scmp.eq.s32.totalorder %s30, 1
      %p268 = por %p266, %p267
      %p270 = scmp.ne.s32.totalorder %s255, %s269
      %p271 = scmp.eq.s32.totalorder %s30, 0
      %p272 = por %p270, %p271
      %s274 = sadd.s32 %s273, 1
      %p277 = scmp.eq.s32.totalorder %s24, 1
      %p278 = scmp.ne.s32.totalorder %s273, %s275
      %p279 = scmp.eq.s32.totalorder %s24, 0
      %p280 = por %p278, %p279
      %p281 = scmp.ne.s32.totalorder %s273, %s275
      %p282 = scmp.eq.s32.totalorder %s29, 1
      %p283 = por %p281, %p282
      %p284 = scmp.ne.s32.totalorder %s275, %s276
      %p285 = scmp.eq.s32.totalorder %s29, 0
      %p286 = por %p284, %p285
      %p287 = scmp.ne.s32.totalorder %s275, %s276
      %p288 = scmp.eq.s32.totalorder %s30, 1
      %p289 = por %p287, %p288
      %p291 = scmp.ne.s32.totalorder %s276, %s290
      %p292 = scmp.eq.s32.totalorder %s30, 0
      %p293 = por %p291, %p292
      %s295 = sadd.s32 %s294, 1
      %p298 = scmp.eq.s32.totalorder %s24, 1
      %p299 = scmp.ne.s32.totalorder %s294, %s296
      %p300 = scmp.eq.s32.totalorder %s24, 0
      %p301 = por %p299, %p300
      %p302 = scmp.ne.s32.totalorder %s294, %s296
      %p303 = scmp.eq.s32.totalorder %s29, 1
      %p304 = por %p302, %p303
      %p305 = scmp.ne.s32.totalorder %s296, %s297
      %p306 = scmp.eq.s32.totalorder %s29, 0
      %p307 = por %p305, %p306
      %p308 = scmp.ne.s32.totalorder %s296, %s297
      %p309 = scmp.eq.s32.totalorder %s30, 1
      %p310 = por %p308, %p309
      %p312 = scmp.ne.s32.totalorder %s297, %s311
      %p313 = scmp.eq.s32.totalorder %s30, 0
      %p314 = por %p312, %p313
      %s316 = sadd.s32 %s315, 1
      %p319 = scmp.eq.s32.totalorder %s24, 1
      %p320 = scmp.ne.s32.totalorder %s315, %s317
      %p321 = scmp.eq.s32.totalorder %s24, 0
      %p322 = por %p320, %p321
      %p323 = scmp.ne.s32.totalorder %s315, %s317
      %p324 = scmp.eq.s32.totalorder %s29, 1
      %p325 = por %p323, %p324
      %p326 = scmp.ne.s32.totalorder %s317, %s318
      %p327 = scmp.eq.s32.totalorder %s29, 0
      %p328 = por %p326, %p327
      %p329 = scmp.ne.s32.totalorder %s317, %s318
      %p330 = scmp.eq.s32.totalorder %s30, 1
      %p331 = por %p329, %p330
      %p333 = scmp.ne.s32.totalorder %s318, %s332
      %p334 = scmp.eq.s32.totalorder %s30, 0
      %p335 = por %p333, %p334
      %s336 = ssub.s32 %s24, %s31
      %p337 = scmp.eq.s32.totalorder %s336, 0
      %s339 = sadd.s32 %s338, 1
      %s340 = scalar_select %p337, %s338, %s339
      %p343 = pneg %p337
      %p344 = scmp.eq.s32.totalorder %s24, 1
      %p345 = por %p343, %p344
      %p346 = scmp.ne.s32.totalorder %s338, %s341
      %p347 = scmp.eq.s32.totalorder %s24, 0
      %p348 = por %p346, %p347
      %p349 = scmp.ne.s32.totalorder %s338, %s341
      %p350 = scmp.eq.s32.totalorder %s29, 1
      %p351 = por %p349, %p350
      %p352 = scmp.ne.s32.totalorder %s341, %s342
      %p353 = scmp.eq.s32.totalorder %s29, 0
      %p354 = por %p352, %p353
      %p355 = scmp.ne.s32.totalorder %s341, %s342
      %p356 = scmp.eq.s32.totalorder %s30, 1
      %p357 = por %p355, %p356
      %p359 = scmp.ne.s32.totalorder %s342, %s358
      %p360 = scmp.eq.s32.totalorder %s30, 0
      %p361 = por %p359, %p360
      %p362 = scmp.le.s32.totalorder 1, %s24
      %p363 = scmp.lt.s32.totalorder %s24, 3
      %p364 = pnand %p362, %p363
      %p365 = pneg %p364
      // Predicated region
      $region9: #{tpu_custom_call.1} parent=5 // pred_check
        _
      $region10: #{tpu_custom_call.1} parent=5 // pred_check_branch
        %367 = sbr.rel (%p364) target = $region12
      $region11: #{tpu_custom_call.1} parent=5 // pred_region
        %s368 = ssub.s32 %s24, 1
        // Predicated region
        $region13: #{tpu_custom_call.1} parent=11 // pred_check
          %p369 = pneg %p97
        $region14: #{tpu_custom_call.1} parent=11 // pred_check_branch
          %371 = sbr.rel (%p369) target = $region16
        $region15: #{tpu_custom_call.1} parent=11 // pred_region
          _
        $region16: #{tpu_custom_call.1} parent=11 // pred_fallthru
          _
        // Predicated region
        $region17: #{tpu_custom_call.1} parent=11 // pred_check
          %p372 = pneg %p118
        $region18: #{tpu_custom_call.1} parent=11 // pred_check_branch
          %374 = sbr.rel (%p372) target = $region20
        $region19: #{tpu_custom_call.1} parent=11 // pred_region
          _
        $region20: #{tpu_custom_call.1} parent=11 // pred_fallthru
          _
        // Predicated region
        $region21: #{tpu_custom_call.1} parent=11 // pred_check
          %p375 = pneg %p139
        $region22: #{tpu_custom_call.1} parent=11 // pred_check_branch
          %377 = sbr.rel (%p375) target = $region24
        $region23: #{tpu_custom_call.1} parent=11 // pred_region
          %379 = vsyncadd [#allocation3], 0
          %s380 = sshll.u32 %s4, 4
          %s381 = int_to_ptr.hbm [resolvable:$true] %s380
          %s382 = sshll.u32 [#allocation2], 4
          %s383 = int_to_ptr.vmem [resolvable:$true] %s382
          %388 = dma.hbm_to_vmem [thread:$0]  %s381, 4096, %s383, [#allocation3], 128, 128, 8
        $region24: #{tpu_custom_call.1} parent=11 // pred_fallthru
          _
        // Predicated region
        $region25: #{tpu_custom_call.1} parent=11 // pred_check
          %p389 = pneg %p160
        $region26: #{tpu_custom_call.1} parent=11 // pred_check_branch
          %391 = sbr.rel (%p389) target = $region28
        $region27: #{tpu_custom_call.1} parent=11 // pred_region
          _
        $region28: #{tpu_custom_call.1} parent=11 // pred_fallthru
          _
        // Predicated region
        $region29: #{tpu_custom_call.1} parent=11 // pred_check
          %p392 = pneg %p181
        $region30: #{tpu_custom_call.1} parent=11 // pred_check_branch
          %394 = sbr.rel (%p392) target = $region32
        $region31: #{tpu_custom_call.1} parent=11 // pred_region
          _
        $region32: #{tpu_custom_call.1} parent=11 // pred_fallthru
          _
        // Predicated region
        $region33: #{tpu_custom_call.1} parent=11 // pred_check
          %p395 = pneg %p202
        $region34: #{tpu_custom_call.1} parent=11 // pred_check_branch
          %397 = sbr.rel (%p395) target = $region36
        $region35: #{tpu_custom_call.1} parent=11 // pred_region
          _
        $region36: #{tpu_custom_call.1} parent=11 // pred_fallthru
          _
        // Predicated region
        $region37: #{tpu_custom_call.1} parent=11 // pred_check
          %p398 = pneg %p223
        $region38: #{tpu_custom_call.1} parent=11 // pred_check_branch
          %400 = sbr.rel (%p398) target = $region40
        $region39: #{tpu_custom_call.1} parent=11 // pred_region
          _
        $region40: #{tpu_custom_call.1} parent=11 // pred_fallthru
          _
        // Predicated region
        $region41: #{tpu_custom_call.1} parent=11 // pred_check
          %p401 = pneg %p244
        $region42: #{tpu_custom_call.1} parent=11 // pred_check_branch
          %403 = sbr.rel (%p401) target = $region44
        $region43: #{tpu_custom_call.1} parent=11 // pred_region
          _
        $region44: #{tpu_custom_call.1} parent=11 // pred_fallthru
          _
        // Predicated region
        $region45: #{tpu_custom_call.1} parent=11 // pred_check
          %p404 = pneg %p265
        $region46: #{tpu_custom_call.1} parent=11 // pred_check_branch
          %406 = sbr.rel (%p404) target = $region48
        $region47: #{tpu_custom_call.1} parent=11 // pred_region
          _
        $region48: #{tpu_custom_call.1} parent=11 // pred_fallthru
          _
        // Predicated region
        $region49: #{tpu_custom_call.1} parent=11 // pred_check
          %p407 = pneg %p286
        $region50: #{tpu_custom_call.1} parent=11 // pred_check_branch
          %409 = sbr.rel (%p407) target = $region52
        $region51: #{tpu_custom_call.1} parent=11 // pred_region
          _
        $region52: #{tpu_custom_call.1} parent=11 // pred_fallthru
          _
        // Predicated region
        $region53: #{tpu_custom_call.1} parent=11 // pred_check
          %p410 = pneg %p307
        $region54: #{tpu_custom_call.1} parent=11 // pred_check_branch
          %412 = sbr.rel (%p410) target = $region56
        $region55: #{tpu_custom_call.1} parent=11 // pred_region
          _
        $region56: #{tpu_custom_call.1} parent=11 // pred_fallthru
          _
        // Predicated region
        $region57: #{tpu_custom_call.1} parent=11 // pred_check
          %p413 = pneg %p328
        $region58: #{tpu_custom_call.1} parent=11 // pred_check_branch
          %415 = sbr.rel (%p413) target = $region60
        $region59: #{tpu_custom_call.1} parent=11 // pred_region
          _
        $region60: #{tpu_custom_call.1} parent=11 // pred_fallthru
          _
      $region12: #{tpu_custom_call.1} parent=5 // pred_fallthru
        _
      %p416 = scmp.lt.s32.totalorder %s24, 2
      // Predicated region
      $region61: #{tpu_custom_call.1} parent=5 // pred_check
        %p417 = pneg %p416
      $region62: #{tpu_custom_call.1} parent=5 // pred_check_branch
        %419 = sbr.rel (%p417) target = $region64
      $region63: #{tpu_custom_call.1} parent=5 // pred_region
        // Predicated region
        $region65: #{tpu_custom_call.1} parent=63 // pred_check
          %p420 = pneg %p44
        $region66: #{tpu_custom_call.1} parent=63 // pred_check_branch
          %422 = sbr.rel (%p420) target = $region68
        $region67: #{tpu_custom_call.1} parent=63 // pred_region
          %s423 = smul.u32 2, %s24
          %p424 = scmp.lt.s32.totalorder %s423, 3
          %s425 = scalar_select %p424, %s423, 3
          %s426 = smul.addr %s425, 8
          %s427 = scalar_lea.vmem %s0, %s426
          %s428 = smul.u32 2, %s24
        $region68: #{tpu_custom_call.1} parent=63 // pred_fallthru
          _
        // Predicated region
        $region69: #{tpu_custom_call.1} parent=63 // pred_check
          %p429 = pneg %p70
        $region70: #{tpu_custom_call.1} parent=63 // pred_check_branch
          %431 = sbr.rel (%p429) target = $region72
        $region71: #{tpu_custom_call.1} parent=63 // pred_region
          %s432 = smul.u32 2, %s24
          %p433 = scmp.lt.s32.totalorder %s432, 3
          %s434 = scalar_select %p433, %s432, 3
          %s435 = smul.addr %s434, 8
          %s436 = scalar_lea.vmem %s1, %s435
          %s437 = smul.u32 2, %s24
        $region72: #{tpu_custom_call.1} parent=63 // pred_fallthru
          _
      $region64: #{tpu_custom_call.1} parent=5 // pred_fallthru
        _
      %p438 = scmp.le.s32.totalorder 1, %s24
      %p439 = scmp.lt.s32.totalorder %s24, 3
      %p440 = pnand %p438, %p439
      %p441 = pneg %p440
      // Predicated region
      $region73: #{tpu_custom_call.1} parent=5 // pred_check
        _
      $region74: #{tpu_custom_call.1} parent=5 // pred_check_branch
        %443 = sbr.rel (%p440) target = $region76
      $region75: #{tpu_custom_call.1} parent=5 // pred_region
        %s444 = ssub.s32 %s24, 1
        // Predicated region
        $region77: #{tpu_custom_call.1} parent=75 // pred_check
          %p445 = pneg %p139
        $region78: #{tpu_custom_call.1} parent=75 // pred_check_branch
          %447 = sbr.rel (%p445) target = $region80
        $region79: #{tpu_custom_call.1} parent=75 // pred_region
          %449 = dma.done [#allocation3], 4096
        $region80: #{tpu_custom_call.1} parent=75 // pred_fallthru
          _
        %s450 = smul.u32 2, %s29
        %p451 = scmp.lt.s32.totalorder %s450, 3
        %s452 = scalar_select %p451, %s450, 3
        %s453 = smul.addr %s452, 8
        %s454 = scalar_lea.vmem %s0, %s453
        %p455 = pneg %p50
        %p456 = pneg %p47
        %s457 = smul.u32 2, %s29
        %p458 = scmp.lt.s32.totalorder %s457, 3
        %s459 = scalar_select %p458, %s457, 3
        %s460 = smul.addr %s459, 8
        %s461 = scalar_lea.vmem %s1, %s460
        %p462 = pneg %p76
        %p463 = pneg %p73
        %p464 = pneg %p97
        %p465 = pneg %p94
        %p466 = pneg %p118
        %p467 = pneg %p115
        %p468 = pneg %p139
        %p469 = pneg %p136
        %p470 = pneg %p160
        %p471 = pneg %p157
        %p472 = pneg %p181
        %p473 = pneg %p178
        %p474 = pneg %p202
        %p475 = pneg %p199
        %p476 = pneg %p223
        %p477 = pneg %p220
        %p478 = pneg %p244
        %p479 = pneg %p241
        %p480 = pneg %p265
        %p481 = pneg %p262
        %p482 = pneg %p286
        %p483 = pneg %p283
        %p484 = pneg %p307
        %p485 = pneg %p304
        %p486 = pneg %p328
        %p487 = pneg %p325
        %p488 = pneg %p354
        %p489 = pneg %p351
        %s490 = sand.u32 %s341, 1
        %s491 = scalar_lea.sflag [#allocation4], %s490
        %s492 = sand.u32 %s341, 1
        %s493 = smul.addr %s492, 16
        %s494 = scalar_lea.vmem [#allocation5], %s493
        %s495 = smul.u32 2, %s29
        %p496 = scmp.lt.s32.totalorder %s495, 3
        %s497 = scalar_select %p496, %s495, 3
        %s498 = smul.addr %s497, 8
        %s499 = scalar_lea.vmem %s0, %s498
        %s500 = smul.u32 2, %s29
        %s501 = smul.u32 2, %s29
        %p502 = scmp.lt.s32.totalorder %s501, 3
        %s503 = scalar_select %p502, %s501, 3
        %s504 = smul.addr %s503, 8
        %s505 = scalar_lea.vmem %s1, %s504
        %s506 = smul.u32 2, %s29
        %s507 = smul.u32 2, %s29
        %v508 = vld [vmem:[%s2] sm:$0xff]
        %v509 = vld [vmem:[%s3] sm:$0xff]
        %v510 = vld [vmem:[#allocation2] sm:$0xff]
        %v511 = vld [vmem:[#allocation2 + $0x8] sm:$0xff]
        %v512 = vld [vmem:[#allocation2 + $0x10] sm:$0xff]
        %v513 = vld [vmem:[#allocation2 + $0x18] sm:$0xff]
        %v514 = vld [vmem:[#allocation2 + $0x20] sm:$0xff]
        %v515 = vld [vmem:[#allocation2 + $0x28] sm:$0xff]
        %v516 = vld [vmem:[#allocation2 + $0x30] sm:$0xff]
        %v517 = vld [vmem:[#allocation2 + $0x38] sm:$0xff]
        %v518 = vld [vmem:[#allocation2 + $0x40] sm:$0xff]
        %v519 = vld [vmem:[#allocation2 + $0x48] sm:$0xff]
        %v520 = vld [vmem:[#allocation2 + $0x50] sm:$0xff]
        %v521 = vld [vmem:[#allocation2 + $0x58] sm:$0xff]
        %v522 = vld [vmem:[#allocation2 + $0x60] sm:$0xff]
        %v523 = vld [vmem:[#allocation2 + $0x68] sm:$0xff]
        %v524 = vld [vmem:[#allocation2 + $0x70] sm:$0xff]
        %v525 = vld [vmem:[#allocation2 + $0x78] sm:$0xff]
        %v526 = vld [vmem:[#allocation2 + $0x80] sm:$0xff]
        %v527 = vld [vmem:[#allocation2 + $0x88] sm:$0xff]
        %v528 = vld [vmem:[#allocation2 + $0x90] sm:$0xff]
        %v529 = vld [vmem:[#allocation2 + $0x98] sm:$0xff]
        %v530 = vld [vmem:[#allocation2 + $0xa0] sm:$0xff]
        %v531 = vld [vmem:[#allocation2 + $0xa8] sm:$0xff]
        %v532 = vld [vmem:[#allocation2 + $0xb0] sm:$0xff]
        %v533 = vld [vmem:[#allocation2 + $0xb8] sm:$0xff]
        %v534 = vld [vmem:[#allocation2 + $0xc0] sm:$0xff]
        %v535 = vld [vmem:[#allocation2 + $0xc8] sm:$0xff]
        %v536 = vld [vmem:[#allocation2 + $0xd0] sm:$0xff]
        %v537 = vld [vmem:[#allocation2 + $0xd8] sm:$0xff]
        %v538 = vld [vmem:[#allocation2 + $0xe0] sm:$0xff]
        %v539 = vld [vmem:[#allocation2 + $0xe8] sm:$0xff]
        %v540 = vld [vmem:[#allocation2 + $0xf0] sm:$0xff]
        %v541 = vld [vmem:[#allocation2 + $0xf8] sm:$0xff]
        %v542 = vld [vmem:[%s499] sm:$0xff]
        %v543 = vld [vmem:[%s505] sm:$0xff]
        %vm544 = vcmask 261120
        %v546 = vsel %vm544, %v508, 0
        %v549 = vsel %vm544, %v542, 0
        %551 = vmatpush.xpose.msra.mxu0 0.0
        %552 = vmatpush.xpose.msra.mxu0 0.0
        %553 = vmatpush.xpose.msra.mxu0 0.0
        %554 = vmatpush.xpose.msra.mxu0 0.0
        %555 = vmatpush.xpose.msra.mxu0 0.0
        %556 = vmatpush.xpose.msra.mxu0 0.0
        %557 = vmatpush.xpose.msra.mxu0 0.0
        %558 = vmatpush.xpose.msra.mxu0 0.0
        %559 = vmatpush.xpose.msra.mxu0 0.0
        %560 = vmatpush.xpose.msra.mxu0 0.0
        %561 = vmatpush.xpose.msra.mxu0 0.0
        %562 = vmatpush.xpose.msra.mxu0 0.0
        %563 = vmatpush.xpose.msra.mxu0 0.0
        %564 = vmatpush.xpose.msra.mxu0 0.0
        %565 = vmatpush.xpose.msra.mxu0 0.0
        %566 = vmatpush.xpose.msra.mxu0 %v549
        %567 = vmatmul.f32.gmra.mxu0 %v546
        %v568 = vpop.f32.mrf.mxu0
        %v569 = vadd.f32 0.0, %v568
        %570 = vdwg.mxu0
        %v572 = vsel %vm544, %v509, 0
        %574 = vmatpush.xpose.msra.mxu0 0.0
        %575 = vmatpush.xpose.msra.mxu0 0.0
        %576 = vmatpush.xpose.msra.mxu0 0.0
        %577 = vmatpush.xpose.msra.mxu0 0.0
        %578 = vmatpush.xpose.msra.mxu0 0.0
        %579 = vmatpush.xpose.msra.mxu0 0.0
        %580 = vmatpush.xpose.msra.mxu0 0.0
        %581 = vmatpush.xpose.msra.mxu0 0.0
        %582 = vmatpush.xpose.msra.mxu0 0.0
        %583 = vmatpush.xpose.msra.mxu0 0.0
        %584 = vmatpush.xpose.msra.mxu0 0.0
        %585 = vmatpush.xpose.msra.mxu0 0.0
        %586 = vmatpush.xpose.msra.mxu0 0.0
        %587 = vmatpush.xpose.msra.mxu0 0.0
        %588 = vmatpush.xpose.msra.mxu0 0.0
        %589 = vmatpush.xpose.msra.mxu0 %v549
        %590 = vmatmul.f32.gmra.mxu0 %v572
        %v591 = vpop.f32.mrf.mxu0
        %v592 = vadd.f32 0.0, %v591
        %593 = vdwg.mxu0
        %v594 = vperm.slane %v569, 0
        %v595 = vlaneseq
        %v596 = vshrl.u32 %v595, 7
        %598 = vset.pattern.permute.xlu0 %v596
        %599 = vperm.xlu0 %598, %v594
        %v600 = vpop.permute.xlu0 %599
        %v601 = vperm.slane %v569, 1
        %v602 = vlaneseq
        %v603 = vshrl.u32 %v602, 7
        %605 = vset.pattern.permute.xlu0 %v603
        %606 = vperm.xlu0 %605, %v601
        %v607 = vpop.permute.xlu0 %606
        %v608 = vperm.slane %v569, 2
        %v609 = vlaneseq
        %v610 = vshrl.u32 %v609, 7
        %612 = vset.pattern.permute.xlu0 %v610
        %613 = vperm.xlu0 %612, %v608
        %v614 = vpop.permute.xlu0 %613
        %v615 = vperm.slane %v569, 3
        %v616 = vlaneseq
        %v617 = vshrl.u32 %v616, 7
        %619 = vset.pattern.permute.xlu0 %v617
        %620 = vperm.xlu0 %619, %v615
        %v621 = vpop.permute.xlu0 %620
        %v622 = vperm.slane %v569, 4
        %v623 = vlaneseq
        %v624 = vshrl.u32 %v623, 7
        %626 = vset.pattern.permute.xlu0 %v624
        %627 = vperm.xlu0 %626, %v622
        %v628 = vpop.permute.xlu0 %627
        %v629 = vperm.slane %v569, 5
        %v630 = vlaneseq
        %v631 = vshrl.u32 %v630, 7
        %633 = vset.pattern.permute.xlu0 %v631
        %634 = vperm.xlu0 %633, %v629
        %v635 = vpop.permute.xlu0 %634
        %v636 = vperm.slane %v569, 6
        %v637 = vlaneseq
        %v638 = vshrl.u32 %v637, 7
        %640 = vset.pattern.permute.xlu0 %v638
        %641 = vperm.xlu0 %640, %v636
        %v642 = vpop.permute.xlu0 %641
        %v643 = vperm.slane %v569, 7
        %v644 = vlaneseq
        %v645 = vshrl.u32 %v644, 7
        %647 = vset.pattern.permute.xlu0 %v645
        %648 = vperm.xlu0 %647, %v643
        %v649 = vpop.permute.xlu0 %648
        %v651 = vrot.slane %v592, 1
        %v652 = vrot.slane %v592, 2
        %v653 = vrot.slane %v592, 3
        %v654 = vrot.slane %v592, 4
        %v655 = vrot.slane %v592, 5
        %v656 = vrot.slane %v592, 6
        %v657 = vrot.slane %v592, 7
        %v658 = vperm.slane %v592, 0
        %v659 = vperm.slane %v651, 0
        %v660 = vperm.slane %v652, 0
        %v661 = vperm.slane %v653, 0
        %v662 = vperm.slane %v654, 0
        %v663 = vperm.slane %v655, 0
        %v664 = vperm.slane %v656, 0
        %v665 = vperm.slane %v657, 0
        %v674 = vadd.f32 %v600, %v658
        %v675 = vadd.f32 %v607, %v659
        %v676 = vadd.f32 %v614, %v660
        %v677 = vadd.f32 %v621, %v661
        %v678 = vadd.f32 %v628, %v662
        %v679 = vadd.f32 %v635, %v663
        %v680 = vadd.f32 %v642, %v664
        %v681 = vadd.f32 %v649, %v665
        %vm682 = vcmp.ge.f32.partialorder %v674, 0.0
        %vm683 = vcmp.ge.f32.partialorder %v675, 0.0
        %vm684 = vcmp.ge.f32.partialorder %v676, 0.0
        %vm685 = vcmp.ge.f32.partialorder %v677, 0.0
        %vm686 = vcmp.ge.f32.partialorder %v678, 0.0
        %vm687 = vcmp.ge.f32.partialorder %v679, 0.0
        %vm688 = vcmp.ge.f32.partialorder %v680, 0.0
        %vm689 = vcmp.ge.f32.partialorder %v681, 0.0
        %v690 = vmul.f32 %v674, 0.2
        %v691 = vmul.f32 %v675, 0.2
        %v692 = vmul.f32 %v676, 0.2
        %v693 = vmul.f32 %v677, 0.2
        %v694 = vmul.f32 %v678, 0.2
        %v695 = vmul.f32 %v679, 0.2
        %v696 = vmul.f32 %v680, 0.2
        %v697 = vmul.f32 %v681, 0.2
        %v698 = vsel %vm682, %v674, %v690
        %v699 = vsel %vm683, %v675, %v691
        %v700 = vsel %vm684, %v676, %v692
        %v701 = vsel %vm685, %v677, %v693
        %v702 = vsel %vm686, %v678, %v694
        %v703 = vsel %vm687, %v679, %v695
        %v704 = vsel %vm688, %v680, %v696
        %v705 = vsel %vm689, %v681, %v697
        %v706 = vadd.f32 %v698, %v543
        %v707 = vadd.f32 %v699, %v543
        %v708 = vadd.f32 %v700, %v543
        %v709 = vadd.f32 %v701, %v543
        %v710 = vadd.f32 %v702, %v543
        %v711 = vadd.f32 %v703, %v543
        %v712 = vadd.f32 %v704, %v543
        %v713 = vadd.f32 %v705, %v543
        %vm714 = vcmask 64512
        %v715 = vsel %vm714, %v706, -inf
        %716 = vmax.xlane.f32.xlu0 %v715
        %v717 = vpop.xlane.xlu0 %716
        %v718 = vsel %vm714, %v707, -inf
        %719 = vmax.xlane.f32.xlu0 %v718
        %v720 = vpop.xlane.xlu0 %719
        %v721 = vsel %vm714, %v708, -inf
        %722 = vmax.xlane.f32.xlu0 %v721
        %v723 = vpop.xlane.xlu0 %722
        %v724 = vsel %vm714, %v709, -inf
        %725 = vmax.xlane.f32.xlu0 %v724
        %v726 = vpop.xlane.xlu0 %725
        %v727 = vsel %vm714, %v710, -inf
        %728 = vmax.xlane.f32.xlu0 %v727
        %v729 = vpop.xlane.xlu0 %728
        %v730 = vsel %vm714, %v711, -inf
        %731 = vmax.xlane.f32.xlu0 %v730
        %v732 = vpop.xlane.xlu0 %731
        %v733 = vsel %vm714, %v712, -inf
        %734 = vmax.xlane.f32.xlu0 %v733
        %v735 = vpop.xlane.xlu0 %734
        %v736 = vsel %vm714, %v713, -inf
        %737 = vmax.xlane.f32.xlu0 %v736
        %v738 = vpop.xlane.xlu0 %737
        %v739 = vsub.f32 %v706, %v717
        %v740 = vsub.f32 %v707, %v720
        %v741 = vsub.f32 %v708, %v723
        %v742 = vsub.f32 %v709, %v726
        %v743 = vsub.f32 %v710, %v729
        %v744 = vsub.f32 %v711, %v732
        %v745 = vsub.f32 %v712, %v735
        %v746 = vsub.f32 %v713, %v738
        %v747 = vmul.f32 %v739, 1.442695
        %v748 = vpow.pop %v747
        %v749 = vmul.f32 %v740, 1.442695
        %v750 = vpow.pop %v749
        %v751 = vmul.f32 %v741, 1.442695
        %v752 = vpow.pop %v751
        %v753 = vmul.f32 %v742, 1.442695
        %v754 = vpow.pop %v753
        %v755 = vmul.f32 %v743, 1.442695
        %v756 = vpow.pop %v755
        %v757 = vmul.f32 %v744, 1.442695
        %v758 = vpow.pop %v757
        %v759 = vmul.f32 %v745, 1.442695
        %v760 = vpow.pop %v759
        %v761 = vmul.f32 %v746, 1.442695
        %v762 = vpow.pop %v761
        %v763 = vsel %vm714, %v748, 0.0
        %764 = vadd.xlane.f32.xlu0 %v763
        %v765 = vpop.xlane.xlu0 %764
        %v766 = vsel %vm714, %v750, 0.0
        %767 = vadd.xlane.f32.xlu0 %v766
        %v768 = vpop.xlane.xlu0 %767
        %v769 = vsel %vm714, %v752, 0.0
        %770 = vadd.xlane.f32.xlu0 %v769
        %v771 = vpop.xlane.xlu0 %770
        %v772 = vsel %vm714, %v754, 0.0
        %773 = vadd.xlane.f32.xlu0 %v772
        %v774 = vpop.xlane.xlu0 %773
        %v775 = vsel %vm714, %v756, 0.0
        %776 = vadd.xlane.f32.xlu0 %v775
        %v777 = vpop.xlane.xlu0 %776
        %v778 = vsel %vm714, %v758, 0.0
        %779 = vadd.xlane.f32.xlu0 %v778
        %v780 = vpop.xlane.xlu0 %779
        %v781 = vsel %vm714, %v760, 0.0
        %782 = vadd.xlane.f32.xlu0 %v781
        %v783 = vpop.xlane.xlu0 %782
        %v784 = vsel %vm714, %v762, 0.0
        %785 = vadd.xlane.f32.xlu0 %v784
        %v786 = vpop.xlane.xlu0 %785
        %v787 = vrcp.pop %v765
        %v788 = vrcp.pop %v768
        %v789 = vrcp.pop %v771
        %v790 = vrcp.pop %v774
        %v791 = vrcp.pop %v777
        %v792 = vrcp.pop %v780
        %v793 = vrcp.pop %v783
        %v794 = vrcp.pop %v786
        %v795 = vmul.f32 %v748, %v787
        %v796 = vmul.f32 %v750, %v788
        %v797 = vmul.f32 %v752, %v789
        %v798 = vmul.f32 %v754, %v790
        %v799 = vmul.f32 %v756, %v791
        %v800 = vmul.f32 %v758, %v792
        %v801 = vmul.f32 %v760, %v793
        %v802 = vmul.f32 %v762, %v794
        %v804 = vsel %vm714, %v795, 0
        %v807 = vsel %vm714, %v796, 0
        %v810 = vsel %vm714, %v797, 0
        %v813 = vsel %vm714, %v798, 0
        %v816 = vsel %vm714, %v799, 0
        %v819 = vsel %vm714, %v800, 0
        %v822 = vsel %vm714, %v801, 0
        %v825 = vsel %vm714, %v802, 0
        %827 = vmatpush.msra.mxu0 0.0
        %828 = vmatpush.msra.mxu0 0.0
        %829 = vmatpush.msra.mxu0 0.0
        %830 = vmatpush.msra.mxu0 0.0
        %831 = vmatpush.msra.mxu0 0.0
        %832 = vmatpush.msra.mxu0 0.0
        %833 = vmatpush.msra.mxu0 0.0
        %834 = vmatpush.msra.mxu0 0.0
        %835 = vmatpush.msra.mxu0 0.0
        %836 = vmatpush.msra.mxu0 0.0
        %837 = vmatpush.msra.mxu0 0.0
        %838 = vmatpush.msra.mxu0 0.0
        %839 = vmatpush.msra.mxu0 0.0
        %840 = vmatpush.msra.mxu0 0.0
        %841 = vmatpush.msra.mxu0 0.0
        %842 = vmatpush.msra.mxu0 %v542
        %843 = vmatmul.f32.gmra.mxu0 %v804
        %v844 = vpop.f32.mrf.mxu0
        %v845 = vadd.f32 0.0, %v844
        %846 = vmatmul.f32.gmra.mxu0 %v807
        %v847 = vpop.f32.mrf.mxu0
        %v848 = vadd.f32 0.0, %v847
        %849 = vmatmul.f32.gmra.mxu0 %v810
        %v850 = vpop.f32.mrf.mxu0
        %v851 = vadd.f32 0.0, %v850
        %852 = vmatmul.f32.gmra.mxu0 %v813
        %v853 = vpop.f32.mrf.mxu0
        %v854 = vadd.f32 0.0, %v853
        %855 = vmatmul.f32.gmra.mxu0 %v816
        %v856 = vpop.f32.mrf.mxu0
        %v857 = vadd.f32 0.0, %v856
        %858 = vmatmul.f32.gmra.mxu0 %v819
        %v859 = vpop.f32.mrf.mxu0
        %v860 = vadd.f32 0.0, %v859
        %861 = vmatmul.f32.gmra.mxu0 %v822
        %v862 = vpop.f32.mrf.mxu0
        %v863 = vadd.f32 0.0, %v862
        %864 = vmatmul.f32.gmra.mxu0 %v825
        %v865 = vpop.f32.mrf.mxu0
        %v866 = vadd.f32 0.0, %v865
        %867 = vdwg.mxu0
        %v869 = vsel %vm544, %v845, 0
        %871 = vmatpush.msra.mxu0 0.0
        %872 = vmatpush.msra.mxu0 0.0
        %873 = vmatpush.msra.mxu0 0.0
        %874 = vmatpush.msra.mxu0 0.0
        %875 = vmatpush.msra.mxu0 0.0
        %876 = vmatpush.msra.mxu0 0.0
        %877 = vmatpush.msra.mxu0 0.0
        %878 = vmatpush.msra.mxu0 0.0
        %879 = vmatpush.msra.mxu0 0.0
        %880 = vmatpush.msra.mxu0 0.0
        %881 = vmatpush.msra.mxu0 0.0
        %882 = vmatpush.msra.mxu0 0.0
        %883 = vmatpush.msra.mxu0 %v513
        %884 = vmatpush.msra.mxu0 %v512
        %885 = vmatpush.msra.mxu0 %v511
        %886 = vmatpush.msra.mxu0 %v510
        %887 = vmatmul.f32.gmra.mxu0 %v869
        %v888 = vpop.f32.mrf.mxu0
        %v889 = vadd.f32 0.0, %v888
        %890 = vdwg.mxu0
        %v892 = vsel %vm544, %v848, 0
        %894 = vmatpush.msra.mxu0 0.0
        %895 = vmatpush.msra.mxu0 0.0
        %896 = vmatpush.msra.mxu0 0.0
        %897 = vmatpush.msra.mxu0 0.0
        %898 = vmatpush.msra.mxu0 0.0
        %899 = vmatpush.msra.mxu0 0.0
        %900 = vmatpush.msra.mxu0 0.0
        %901 = vmatpush.msra.mxu0 0.0
        %902 = vmatpush.msra.mxu0 0.0
        %903 = vmatpush.msra.mxu0 0.0
        %904 = vmatpush.msra.mxu0 0.0
        %905 = vmatpush.msra.mxu0 0.0
        %906 = vmatpush.msra.mxu0 %v517
        %907 = vmatpush.msra.mxu0 %v516
        %908 = vmatpush.msra.mxu0 %v515
        %909 = vmatpush.msra.mxu0 %v514
        %910 = vmatmul.f32.gmra.mxu0 %v892
        %v911 = vpop.f32.mrf.mxu0
        %v912 = vadd.f32 0.0, %v911
        %913 = vdwg.mxu0
        %v915 = vsel %vm544, %v851, 0
        %917 = vmatpush.msra.mxu0 0.0
        %918 = vmatpush.msra.mxu0 0.0
        %919 = vmatpush.msra.mxu0 0.0
        %920 = vmatpush.msra.mxu0 0.0
        %921 = vmatpush.msra.mxu0 0.0
        %922 = vmatpush.msra.mxu0 0.0
        %923 = vmatpush.msra.mxu0 0.0
        %924 = vmatpush.msra.mxu0 0.0
        %925 = vmatpush.msra.mxu0 0.0
        %926 = vmatpush.msra.mxu0 0.0
        %927 = vmatpush.msra.mxu0 0.0
        %928 = vmatpush.msra.mxu0 0.0
        %929 = vmatpush.msra.mxu0 %v521
        %930 = vmatpush.msra.mxu0 %v520
        %931 = vmatpush.msra.mxu0 %v519
        %932 = vmatpush.msra.mxu0 %v518
        %933 = vmatmul.f32.gmra.mxu0 %v915
        %v934 = vpop.f32.mrf.mxu0
        %v935 = vadd.f32 0.0, %v934
        %936 = vdwg.mxu0
        %v938 = vsel %vm544, %v854, 0
        %940 = vmatpush.msra.mxu0 0.0
        %941 = vmatpush.msra.mxu0 0.0
        %942 = vmatpush.msra.mxu0 0.0
        %943 = vmatpush.msra.mxu0 0.0
        %944 = vmatpush.msra.mxu0 0.0
        %945 = vmatpush.msra.mxu0 0.0
        %946 = vmatpush.msra.mxu0 0.0
        %947 = vmatpush.msra.mxu0 0.0
        %948 = vmatpush.msra.mxu0 0.0
        %949 = vmatpush.msra.mxu0 0.0
        %950 = vmatpush.msra.mxu0 0.0
        %951 = vmatpush.msra.mxu0 0.0
        %952 = vmatpush.msra.mxu0 %v525
        %953 = vmatpush.msra.mxu0 %v524
        %954 = vmatpush.msra.mxu0 %v523
        %955 = vmatpush.msra.mxu0 %v522
        %956 = vmatmul.f32.gmra.mxu0 %v938
        %v957 = vpop.f32.mrf.mxu0
        %v958 = vadd.f32 0.0, %v957
        %959 = vdwg.mxu0
        %v961 = vsel %vm544, %v857, 0
        %963 = vmatpush.msra.mxu0 0.0
        %964 = vmatpush.msra.mxu0 0.0
        %965 = vmatpush.msra.mxu0 0.0
        %966 = vmatpush.msra.mxu0 0.0
        %967 = vmatpush.msra.mxu0 0.0
        %968 = vmatpush.msra.mxu0 0.0
        %969 = vmatpush.msra.mxu0 0.0
        %970 = vmatpush.msra.mxu0 0.0
        %971 = vmatpush.msra.mxu0 0.0
        %972 = vmatpush.msra.mxu0 0.0
        %973 = vmatpush.msra.mxu0 0.0
        %974 = vmatpush.msra.mxu0 0.0
        %975 = vmatpush.msra.mxu0 %v529
        %976 = vmatpush.msra.mxu0 %v528
        %977 = vmatpush.msra.mxu0 %v527
        %978 = vmatpush.msra.mxu0 %v526
        %979 = vmatmul.f32.gmra.mxu0 %v961
        %v980 = vpop.f32.mrf.mxu0
        %v981 = vadd.f32 0.0, %v980
        %982 = vdwg.mxu0
        %v984 = vsel %vm544, %v860, 0
        %986 = vmatpush.msra.mxu0 0.0
        %987 = vmatpush.msra.mxu0 0.0
        %988 = vmatpush.msra.mxu0 0.0
        %989 = vmatpush.msra.mxu0 0.0
        %990 = vmatpush.msra.mxu0 0.0
        %991 = vmatpush.msra.mxu0 0.0
        %992 = vmatpush.msra.mxu0 0.0
        %993 = vmatpush.msra.mxu0 0.0
        %994 = vmatpush.msra.mxu0 0.0
        %995 = vmatpush.msra.mxu0 0.0
        %996 = vmatpush.msra.mxu0 0.0
        %997 = vmatpush.msra.mxu0 0.0
        %998 = vmatpush.msra.mxu0 %v533
        %999 = vmatpush.msra.mxu0 %v532
        %1000 = vmatpush.msra.mxu0 %v531
        %1001 = vmatpush.msra.mxu0 %v530
        %1002 = vmatmul.f32.gmra.mxu0 %v984
        %v1003 = vpop.f32.mrf.mxu0
        %v1004 = vadd.f32 0.0, %v1003
        %1005 = vdwg.mxu0
        %v1007 = vsel %vm544, %v863, 0
        %1009 = vmatpush.msra.mxu0 0.0
        %1010 = vmatpush.msra.mxu0 0.0
        %1011 = vmatpush.msra.mxu0 0.0
        %1012 = vmatpush.msra.mxu0 0.0
        %1013 = vmatpush.msra.mxu0 0.0
        %1014 = vmatpush.msra.mxu0 0.0
        %1015 = vmatpush.msra.mxu0 0.0
        %1016 = vmatpush.msra.mxu0 0.0
        %1017 = vmatpush.msra.mxu0 0.0
        %1018 = vmatpush.msra.mxu0 0.0
        %1019 = vmatpush.msra.mxu0 0.0
        %1020 = vmatpush.msra.mxu0 0.0
        %1021 = vmatpush.msra.mxu0 %v537
        %1022 = vmatpush.msra.mxu0 %v536
        %1023 = vmatpush.msra.mxu0 %v535
        %1024 = vmatpush.msra.mxu0 %v534
        %1025 = vmatmul.f32.gmra.mxu0 %v1007
        %v1026 = vpop.f32.mrf.mxu0
        %v1027 = vadd.f32 0.0, %v1026
        %1028 = vdwg.mxu0
        %v1030 = vsel %vm544, %v866, 0
        %1032 = vmatpush.msra.mxu0 0.0
        %1033 = vmatpush.msra.mxu0 0.0
        %1034 = vmatpush.msra.mxu0 0.0
        %1035 = vmatpush.msra.mxu0 0.0
        %1036 = vmatpush.msra.mxu0 0.0
        %1037 = vmatpush.msra.mxu0 0.0
        %1038 = vmatpush.msra.mxu0 0.0
        %1039 = vmatpush.msra.mxu0 0.0
        %1040 = vmatpush.msra.mxu0 0.0
        %1041 = vmatpush.msra.mxu0 0.0
        %1042 = vmatpush.msra.mxu0 0.0
        %1043 = vmatpush.msra.mxu0 0.0
        %1044 = vmatpush.msra.mxu0 %v541
        %1045 = vmatpush.msra.mxu0 %v540
        %1046 = vmatpush.msra.mxu0 %v539
        %1047 = vmatpush.msra.mxu0 %v538
        %1048 = vmatmul.f32.gmra.mxu0 %v1030
        %v1049 = vpop.f32.mrf.mxu0
        %v1050 = vadd.f32 0.0, %v1049
        %1051 = vdwg.mxu0
        %v1052 = vadd.f32 %v889, %v912
        %v1053 = vadd.f32 %v1052, %v935
        %v1054 = vadd.f32 %v1053, %v958
        %v1055 = vadd.f32 %v1054, %v981
        %v1056 = vadd.f32 %v1055, %v1004
        %v1057 = vadd.f32 %v1056, %v1027
        %v1058 = vadd.f32 %v1057, %v1050
        %s1059 = scalar_lea.vmem %s499, 8
        %v1060 = vld [vmem:[%s1059] sm:$0xff]
        %s1061 = scalar_lea.vmem %s505, 8
        %v1062 = vld [vmem:[%s1061] sm:$0xff]
        %v1064 = vsel %vm544, %v1060, 0
        %1066 = vmatpush.xpose.msra.mxu0 0.0
        %1067 = vmatpush.xpose.msra.mxu0 0.0
        %1068 = vmatpush.xpose.msra.mxu0 0.0
        %1069 = vmatpush.xpose.msra.mxu0 0.0
        %1070 = vmatpush.xpose.msra.mxu0 0.0
        %1071 = vmatpush.xpose.msra.mxu0 0.0
        %1072 = vmatpush.xpose.msra.mxu0 0.0
        %1073 = vmatpush.xpose.msra.mxu0 0.0
        %1074 = vmatpush.xpose.msra.mxu0 0.0
        %1075 = vmatpush.xpose.msra.mxu0 0.0
        %1076 = vmatpush.xpose.msra.mxu0 0.0
        %1077 = vmatpush.xpose.msra.mxu0 0.0
        %1078 = vmatpush.xpose.msra.mxu0 0.0
        %1079 = vmatpush.xpose.msra.mxu0 0.0
        %1080 = vmatpush.xpose.msra.mxu0 0.0
        %1081 = vmatpush.xpose.msra.mxu0 %v1064
        %1082 = vmatmul.f32.gmra.mxu0 %v546
        %v1083 = vpop.f32.mrf.mxu0
        %v1084 = vadd.f32 0.0, %v1083
        %1085 = vdwg.mxu0
        %1086 = vmatpush.xpose.msra.mxu0 0.0
        %1087 = vmatpush.xpose.msra.mxu0 0.0
        %1088 = vmatpush.xpose.msra.mxu0 0.0
        %1089 = vmatpush.xpose.msra.mxu0 0.0
        %1090 = vmatpush.xpose.msra.mxu0 0.0
        %1091 = vmatpush.xpose.msra.mxu0 0.0
        %1092 = vmatpush.xpose.msra.mxu0 0.0
        %1093 = vmatpush.xpose.msra.mxu0 0.0
        %1094 = vmatpush.xpose.msra.mxu0 0.0
        %1095 = vmatpush.xpose.msra.mxu0 0.0
        %1096 = vmatpush.xpose.msra.mxu0 0.0
        %1097 = vmatpush.xpose.msra.mxu0 0.0
        %1098 = vmatpush.xpose.msra.mxu0 0.0
        %1099 = vmatpush.xpose.msra.mxu0 0.0
        %1100 = vmatpush.xpose.msra.mxu0 0.0
        %1101 = vmatpush.xpose.msra.mxu0 %v1064
        %1102 = vmatmul.f32.gmra.mxu0 %v572
        %v1103 = vpop.f32.mrf.mxu0
        %v1104 = vadd.f32 0.0, %v1103
        %1105 = vdwg.mxu0
        %v1106 = vperm.slane %v1084, 0
        %v1107 = vlaneseq
        %v1108 = vshrl.u32 %v1107, 7
        %1110 = vset.pattern.permute.xlu0 %v1108
        %1111 = vperm.xlu0 %1110, %v1106
        %v1112 = vpop.permute.xlu0 %1111
        %v1113 = vperm.slane %v1084, 1
        %v1114 = vlaneseq
        %v1115 = vshrl.u32 %v1114, 7
        %1117 = vset.pattern.permute.xlu0 %v1115
        %1118 = vperm.xlu0 %1117, %v1113
        %v1119 = vpop.permute.xlu0 %1118
        %v1120 = vperm.slane %v1084, 2
        %v1121 = vlaneseq
        %v1122 = vshrl.u32 %v1121, 7
        %1124 = vset.pattern.permute.xlu0 %v1122
        %1125 = vperm.xlu0 %1124, %v1120
        %v1126 = vpop.permute.xlu0 %1125
        %v1127 = vperm.slane %v1084, 3
        %v1128 = vlaneseq
        %v1129 = vshrl.u32 %v1128, 7
        %1131 = vset.pattern.permute.xlu0 %v1129
        %1132 = vperm.xlu0 %1131, %v1127
        %v1133 = vpop.permute.xlu0 %1132
        %v1134 = vperm.slane %v1084, 4
        %v1135 = vlaneseq
        %v1136 = vshrl.u32 %v1135, 7
        %1138 = vset.pattern.permute.xlu0 %v1136
        %1139 = vperm.xlu0 %1138, %v1134
        %v1140 = vpop.permute.xlu0 %1139
        %v1141 = vperm.slane %v1084, 5
        %v1142 = vlaneseq
        %v1143 = vshrl.u32 %v1142, 7
        %1145 = vset.pattern.permute.xlu0 %v1143
        %1146 = vperm.xlu0 %1145, %v1141
        %v1147 = vpop.permute.xlu0 %1146
        %v1148 = vperm.slane %v1084, 6
        %v1149 = vlaneseq
        %v1150 = vshrl.u32 %v1149, 7
        %1152 = vset.pattern.permute.xlu0 %v1150
        %1153 = vperm.xlu0 %1152, %v1148
        %v1154 = vpop.permute.xlu0 %1153
        %v1155 = vperm.slane %v1084, 7
        %v1156 = vlaneseq
        %v1157 = vshrl.u32 %v1156, 7
        %1159 = vset.pattern.permute.xlu0 %v1157
        %1160 = vperm.xlu0 %1159, %v1155
        %v1161 = vpop.permute.xlu0 %1160
        %v1163 = vrot.slane %v1104, 1
        %v1164 = vrot.slane %v1104, 2
        %v1165 = vrot.slane %v1104, 3
        %v1166 = vrot.slane %v1104, 4
        %v1167 = vrot.slane %v1104, 5
        %v1168 = vrot.slane %v1104, 6
        %v1169 = vrot.slane %v1104, 7
        %v1170 = vperm.slane %v1104, 0
        %v1171 = vperm.slane %v1163, 0
        %v1172 = vperm.slane %v1164, 0
        %v1173 = vperm.slane %v1165, 0
        %v1174 = vperm.slane %v1166, 0
        %v1175 = vperm.slane %v1167, 0
        %v1176 = vperm.slane %v1168, 0
        %v1177 = vperm.slane %v1169, 0
        %v1186 = vadd.f32 %v1112, %v1170
        %v1187 = vadd.f32 %v1119, %v1171
        %v1188 = vadd.f32 %v1126, %v1172
        %v1189 = vadd.f32 %v1133, %v1173
        %v1190 = vadd.f32 %v1140, %v1174
        %v1191 = vadd.f32 %v1147, %v1175
        %v1192 = vadd.f32 %v1154, %v1176
        %v1193 = vadd.f32 %v1161, %v1177
        %vm1194 = vcmp.ge.f32.partialorder %v1186, 0.0
        %vm1195 = vcmp.ge.f32.partialorder %v1187, 0.0
        %vm1196 = vcmp.ge.f32.partialorder %v1188, 0.0
        %vm1197 = vcmp.ge.f32.partialorder %v1189, 0.0
        %vm1198 = vcmp.ge.f32.partialorder %v1190, 0.0
        %vm1199 = vcmp.ge.f32.partialorder %v1191, 0.0
        %vm1200 = vcmp.ge.f32.partialorder %v1192, 0.0
        %vm1201 = vcmp.ge.f32.partialorder %v1193, 0.0
        %v1202 = vmul.f32 %v1186, 0.2
        %v1203 = vmul.f32 %v1187, 0.2
        %v1204 = vmul.f32 %v1188, 0.2
        %v1205 = vmul.f32 %v1189, 0.2
        %v1206 = vmul.f32 %v1190, 0.2
        %v1207 = vmul.f32 %v1191, 0.2
        %v1208 = vmul.f32 %v1192, 0.2
        %v1209 = vmul.f32 %v1193, 0.2
        %v1210 = vsel %vm1194, %v1186, %v1202
        %v1211 = vsel %vm1195, %v1187, %v1203
        %v1212 = vsel %vm1196, %v1188, %v1204
        %v1213 = vsel %vm1197, %v1189, %v1205
        %v1214 = vsel %vm1198, %v1190, %v1206
        %v1215 = vsel %vm1199, %v1191, %v1207
        %v1216 = vsel %vm1200, %v1192, %v1208
        %v1217 = vsel %vm1201, %v1193, %v1209
        %v1218 = vadd.f32 %v1210, %v1062
        %v1219 = vadd.f32 %v1211, %v1062
        %v1220 = vadd.f32 %v1212, %v1062
        %v1221 = vadd.f32 %v1213, %v1062
        %v1222 = vadd.f32 %v1214, %v1062
        %v1223 = vadd.f32 %v1215, %v1062
        %v1224 = vadd.f32 %v1216, %v1062
        %v1225 = vadd.f32 %v1217, %v1062
        %v1226 = vsel %vm714, %v1218, -inf
        %1227 = vmax.xlane.f32.xlu0 %v1226
        %v1228 = vpop.xlane.xlu0 %1227
        %v1229 = vsel %vm714, %v1219, -inf
        %1230 = vmax.xlane.f32.xlu0 %v1229
        %v1231 = vpop.xlane.xlu0 %1230
        %v1232 = vsel %vm714, %v1220, -inf
        %1233 = vmax.xlane.f32.xlu0 %v1232
        %v1234 = vpop.xlane.xlu0 %1233
        %v1235 = vsel %vm714, %v1221, -inf
        %1236 = vmax.xlane.f32.xlu0 %v1235
        %v1237 = vpop.xlane.xlu0 %1236
        %v1238 = vsel %vm714, %v1222, -inf
        %1239 = vmax.xlane.f32.xlu0 %v1238
        %v1240 = vpop.xlane.xlu0 %1239
        %v1241 = vsel %vm714, %v1223, -inf
        %1242 = vmax.xlane.f32.xlu0 %v1241
        %v1243 = vpop.xlane.xlu0 %1242
        %v1244 = vsel %vm714, %v1224, -inf
        %1245 = vmax.xlane.f32.xlu0 %v1244
        %v1246 = vpop.xlane.xlu0 %1245
        %v1247 = vsel %vm714, %v1225, -inf
        %1248 = vmax.xlane.f32.xlu0 %v1247
        %v1249 = vpop.xlane.xlu0 %1248
        %v1250 = vsub.f32 %v1218, %v1228
        %v1251 = vsub.f32 %v1219, %v1231
        %v1252 = vsub.f32 %v1220, %v1234
        %v1253 = vsub.f32 %v1221, %v1237
        %v1254 = vsub.f32 %v1222, %v1240
        %v1255 = vsub.f32 %v1223, %v1243
        %v1256 = vsub.f32 %v1224, %v1246
        %v1257 = vsub.f32 %v1225, %v1249
        %v1258 = vmul.f32 %v1250, 1.442695
        %v1259 = vpow.pop %v1258
        %v1260 = vmul.f32 %v1251, 1.442695
        %v1261 = vpow.pop %v1260
        %v1262 = vmul.f32 %v1252, 1.442695
        %v1263 = vpow.pop %v1262
        %v1264 = vmul.f32 %v1253, 1.442695
        %v1265 = vpow.pop %v1264
        %v1266 = vmul.f32 %v1254, 1.442695
        %v1267 = vpow.pop %v1266
        %v1268 = vmul.f32 %v1255, 1.442695
        %v1269 = vpow.pop %v1268
        %v1270 = vmul.f32 %v1256, 1.442695
        %v1271 = vpow.pop %v1270
        %v1272 = vmul.f32 %v1257, 1.442695
        %v1273 = vpow.pop %v1272
        %v1274 = vsel %vm714, %v1259, 0.0
        %1275 = vadd.xlane.f32.xlu0 %v1274
        %v1276 = vpop.xlane.xlu0 %1275
        %v1277 = vsel %vm714, %v1261, 0.0
        %1278 = vadd.xlane.f32.xlu0 %v1277
        %v1279 = vpop.xlane.xlu0 %1278
        %v1280 = vsel %vm714, %v1263, 0.0
        %1281 = vadd.xlane.f32.xlu0 %v1280
        %v1282 = vpop.xlane.xlu0 %1281
        %v1283 = vsel %vm714, %v1265, 0.0
        %1284 = vadd.xlane.f32.xlu0 %v1283
        %v1285 = vpop.xlane.xlu0 %1284
        %v1286 = vsel %vm714, %v1267, 0.0
        %1287 = vadd.xlane.f32.xlu0 %v1286
        %v1288 = vpop.xlane.xlu0 %1287
        %v1289 = vsel %vm714, %v1269, 0.0
        %1290 = vadd.xlane.f32.xlu0 %v1289
        %v1291 = vpop.xlane.xlu0 %1290
        %v1292 = vsel %vm714, %v1271, 0.0
        %1293 = vadd.xlane.f32.xlu0 %v1292
        %v1294 = vpop.xlane.xlu0 %1293
        %v1295 = vsel %vm714, %v1273, 0.0
        %1296 = vadd.xlane.f32.xlu0 %v1295
        %v1297 = vpop.xlane.xlu0 %1296
        %v1298 = vrcp.pop %v1276
        %v1299 = vrcp.pop %v1279
        %v1300 = vrcp.pop %v1282
        %v1301 = vrcp.pop %v1285
        %v1302 = vrcp.pop %v1288
        %v1303 = vrcp.pop %v1291
        %v1304 = vrcp.pop %v1294
        %v1305 = vrcp.pop %v1297
        %v1306 = vmul.f32 %v1259, %v1298
        %v1307 = vmul.f32 %v1261, %v1299
        %v1308 = vmul.f32 %v1263, %v1300
        %v1309 = vmul.f32 %v1265, %v1301
        %v1310 = vmul.f32 %v1267, %v1302
        %v1311 = vmul.f32 %v1269, %v1303
        %v1312 = vmul.f32 %v1271, %v1304
        %v1313 = vmul.f32 %v1273, %v1305
        %v1315 = vsel %vm714, %v1306, 0
        %v1318 = vsel %vm714, %v1307, 0
        %v1321 = vsel %vm714, %v1308, 0
        %v1324 = vsel %vm714, %v1309, 0
        %v1327 = vsel %vm714, %v1310, 0
        %v1330 = vsel %vm714, %v1311, 0
        %v1333 = vsel %vm714, %v1312, 0
        %v1336 = vsel %vm714, %v1313, 0
        %1338 = vmatpush.msra.mxu0 0.0
        %1339 = vmatpush.msra.mxu0 0.0
        %1340 = vmatpush.msra.mxu0 0.0
        %1341 = vmatpush.msra.mxu0 0.0
        %1342 = vmatpush.msra.mxu0 0.0
        %1343 = vmatpush.msra.mxu0 0.0
        %1344 = vmatpush.msra.mxu0 0.0
        %1345 = vmatpush.msra.mxu0 0.0
        %1346 = vmatpush.msra.mxu0 0.0
        %1347 = vmatpush.msra.mxu0 0.0
        %1348 = vmatpush.msra.mxu0 0.0
        %1349 = vmatpush.msra.mxu0 0.0
        %1350 = vmatpush.msra.mxu0 0.0
        %1351 = vmatpush.msra.mxu0 0.0
        %1352 = vmatpush.msra.mxu0 0.0
        %1353 = vmatpush.msra.mxu0 %v1060
        %1354 = vmatmul.f32.gmra.mxu0 %v1315
        %v1355 = vpop.f32.mrf.mxu0
        %v1356 = vadd.f32 0.0, %v1355
        %1357 = vmatmul.f32.gmra.mxu0 %v1318
        %v1358 = vpop.f32.mrf.mxu0
        %v1359 = vadd.f32 0.0, %v1358
        %1360 = vmatmul.f32.gmra.mxu0 %v1321
        %v1361 = vpop.f32.mrf.mxu0
        %v1362 = vadd.f32 0.0, %v1361
        %1363 = vmatmul.f32.gmra.mxu0 %v1324
        %v1364 = vpop.f32.mrf.mxu0
        %v1365 = vadd.f32 0.0, %v1364
        %1366 = vmatmul.f32.gmra.mxu0 %v1327
        %v1367 = vpop.f32.mrf.mxu0
        %v1368 = vadd.f32 0.0, %v1367
        %1369 = vmatmul.f32.gmra.mxu0 %v1330
        %v1370 = vpop.f32.mrf.mxu0
        %v1371 = vadd.f32 0.0, %v1370
        %1372 = vmatmul.f32.gmra.mxu0 %v1333
        %v1373 = vpop.f32.mrf.mxu0
        %v1374 = vadd.f32 0.0, %v1373
        %1375 = vmatmul.f32.gmra.mxu0 %v1336
        %v1376 = vpop.f32.mrf.mxu0
        %v1377 = vadd.f32 0.0, %v1376
        %1378 = vdwg.mxu0
        %v1380 = vsel %vm544, %v1356, 0
        %1382 = vmatpush.msra.mxu0 0.0
        %1383 = vmatpush.msra.mxu0 0.0
        %1384 = vmatpush.msra.mxu0 0.0
        %1385 = vmatpush.msra.mxu0 0.0
        %1386 = vmatpush.msra.mxu0 0.0
        %1387 = vmatpush.msra.mxu0 0.0
        %1388 = vmatpush.msra.mxu0 0.0
        %1389 = vmatpush.msra.mxu0 0.0
        %1390 = vmatpush.msra.mxu0 0.0
        %1391 = vmatpush.msra.mxu0 0.0
        %1392 = vmatpush.msra.mxu0 0.0
        %1393 = vmatpush.msra.mxu0 0.0
        %1394 = vmatpush.msra.mxu0 %v513
        %1395 = vmatpush.msra.mxu0 %v512
        %1396 = vmatpush.msra.mxu0 %v511
        %1397 = vmatpush.msra.mxu0 %v510
        %1398 = vmatmul.f32.gmra.mxu0 %v1380
        %v1399 = vpop.f32.mrf.mxu0
        %v1400 = vadd.f32 0.0, %v1399
        %1401 = vdwg.mxu0
        %v1403 = vsel %vm544, %v1359, 0
        %1405 = vmatpush.msra.mxu0 0.0
        %1406 = vmatpush.msra.mxu0 0.0
        %1407 = vmatpush.msra.mxu0 0.0
        %1408 = vmatpush.msra.mxu0 0.0
        %1409 = vmatpush.msra.mxu0 0.0
        %1410 = vmatpush.msra.mxu0 0.0
        %1411 = vmatpush.msra.mxu0 0.0
        %1412 = vmatpush.msra.mxu0 0.0
        %1413 = vmatpush.msra.mxu0 0.0
        %1414 = vmatpush.msra.mxu0 0.0
        %1415 = vmatpush.msra.mxu0 0.0
        %1416 = vmatpush.msra.mxu0 0.0
        %1417 = vmatpush.msra.mxu0 %v517
        %1418 = vmatpush.msra.mxu0 %v516
        %1419 = vmatpush.msra.mxu0 %v515
        %1420 = vmatpush.msra.mxu0 %v514
        %1421 = vmatmul.f32.gmra.mxu0 %v1403
        %v1422 = vpop.f32.mrf.mxu0
        %v1423 = vadd.f32 0.0, %v1422
        %1424 = vdwg.mxu0
        %v1426 = vsel %vm544, %v1362, 0
        %1428 = vmatpush.msra.mxu0 0.0
        %1429 = vmatpush.msra.mxu0 0.0
        %1430 = vmatpush.msra.mxu0 0.0
        %1431 = vmatpush.msra.mxu0 0.0
        %1432 = vmatpush.msra.mxu0 0.0
        %1433 = vmatpush.msra.mxu0 0.0
        %1434 = vmatpush.msra.mxu0 0.0
        %1435 = vmatpush.msra.mxu0 0.0
        %1436 = vmatpush.msra.mxu0 0.0
        %1437 = vmatpush.msra.mxu0 0.0
        %1438 = vmatpush.msra.mxu0 0.0
        %1439 = vmatpush.msra.mxu0 0.0
        %1440 = vmatpush.msra.mxu0 %v521
        %1441 = vmatpush.msra.mxu0 %v520
        %1442 = vmatpush.msra.mxu0 %v519
        %1443 = vmatpush.msra.mxu0 %v518
        %1444 = vmatmul.f32.gmra.mxu0 %v1426
        %v1445 = vpop.f32.mrf.mxu0
        %v1446 = vadd.f32 0.0, %v1445
        %1447 = vdwg.mxu0
        %v1449 = vsel %vm544, %v1365, 0
        %1451 = vmatpush.msra.mxu0 0.0
        %1452 = vmatpush.msra.mxu0 0.0
        %1453 = vmatpush.msra.mxu0 0.0
        %1454 = vmatpush.msra.mxu0 0.0
        %1455 = vmatpush.msra.mxu0 0.0
        %1456 = vmatpush.msra.mxu0 0.0
        %1457 = vmatpush.msra.mxu0 0.0
        %1458 = vmatpush.msra.mxu0 0.0
        %1459 = vmatpush.msra.mxu0 0.0
        %1460 = vmatpush.msra.mxu0 0.0
        %1461 = vmatpush.msra.mxu0 0.0
        %1462 = vmatpush.msra.mxu0 0.0
        %1463 = vmatpush.msra.mxu0 %v525
        %1464 = vmatpush.msra.mxu0 %v524
        %1465 = vmatpush.msra.mxu0 %v523
        %1466 = vmatpush.msra.mxu0 %v522
        %1467 = vmatmul.f32.gmra.mxu0 %v1449
        %v1468 = vpop.f32.mrf.mxu0
        %v1469 = vadd.f32 0.0, %v1468
        %1470 = vdwg.mxu0
        %v1472 = vsel %vm544, %v1368, 0
        %1474 = vmatpush.msra.mxu0 0.0
        %1475 = vmatpush.msra.mxu0 0.0
        %1476 = vmatpush.msra.mxu0 0.0
        %1477 = vmatpush.msra.mxu0 0.0
        %1478 = vmatpush.msra.mxu0 0.0
        %1479 = vmatpush.msra.mxu0 0.0
        %1480 = vmatpush.msra.mxu0 0.0
        %1481 = vmatpush.msra.mxu0 0.0
        %1482 = vmatpush.msra.mxu0 0.0
        %1483 = vmatpush.msra.mxu0 0.0
        %1484 = vmatpush.msra.mxu0 0.0
        %1485 = vmatpush.msra.mxu0 0.0
        %1486 = vmatpush.msra.mxu0 %v529
        %1487 = vmatpush.msra.mxu0 %v528
        %1488 = vmatpush.msra.mxu0 %v527
        %1489 = vmatpush.msra.mxu0 %v526
        %1490 = vmatmul.f32.gmra.mxu0 %v1472
        %v1491 = vpop.f32.mrf.mxu0
        %v1492 = vadd.f32 0.0, %v1491
        %1493 = vdwg.mxu0
        %v1495 = vsel %vm544, %v1371, 0
        %1497 = vmatpush.msra.mxu0 0.0
        %1498 = vmatpush.msra.mxu0 0.0
        %1499 = vmatpush.msra.mxu0 0.0
        %1500 = vmatpush.msra.mxu0 0.0
        %1501 = vmatpush.msra.mxu0 0.0
        %1502 = vmatpush.msra.mxu0 0.0
        %1503 = vmatpush.msra.mxu0 0.0
        %1504 = vmatpush.msra.mxu0 0.0
        %1505 = vmatpush.msra.mxu0 0.0
        %1506 = vmatpush.msra.mxu0 0.0
        %1507 = vmatpush.msra.mxu0 0.0
        %1508 = vmatpush.msra.mxu0 0.0
        %1509 = vmatpush.msra.mxu0 %v533
        %1510 = vmatpush.msra.mxu0 %v532
        %1511 = vmatpush.msra.mxu0 %v531
        %1512 = vmatpush.msra.mxu0 %v530
        %1513 = vmatmul.f32.gmra.mxu0 %v1495
        %v1514 = vpop.f32.mrf.mxu0
        %v1515 = vadd.f32 0.0, %v1514
        %1516 = vdwg.mxu0
        %v1518 = vsel %vm544, %v1374, 0
        %1520 = vmatpush.msra.mxu0 0.0
        %1521 = vmatpush.msra.mxu0 0.0
        %1522 = vmatpush.msra.mxu0 0.0
        %1523 = vmatpush.msra.mxu0 0.0
        %1524 = vmatpush.msra.mxu0 0.0
        %1525 = vmatpush.msra.mxu0 0.0
        %1526 = vmatpush.msra.mxu0 0.0
        %1527 = vmatpush.msra.mxu0 0.0
        %1528 = vmatpush.msra.mxu0 0.0
        %1529 = vmatpush.msra.mxu0 0.0
        %1530 = vmatpush.msra.mxu0 0.0
        %1531 = vmatpush.msra.mxu0 0.0
        %1532 = vmatpush.msra.mxu0 %v537
        %1533 = vmatpush.msra.mxu0 %v536
        %1534 = vmatpush.msra.mxu0 %v535
        %1535 = vmatpush.msra.mxu0 %v534
        %1536 = vmatmul.f32.gmra.mxu0 %v1518
        %v1537 = vpop.f32.mrf.mxu0
        %v1538 = vadd.f32 0.0, %v1537
        %1539 = vdwg.mxu0
        %v1541 = vsel %vm544, %v1377, 0
        %1543 = vmatpush.msra.mxu0 0.0
        %1544 = vmatpush.msra.mxu0 0.0
        %1545 = vmatpush.msra.mxu0 0.0
        %1546 = vmatpush.msra.mxu0 0.0
        %1547 = vmatpush.msra.mxu0 0.0
        %1548 = vmatpush.msra.mxu0 0.0
        %1549 = vmatpush.msra.mxu0 0.0
        %1550 = vmatpush.msra.mxu0 0.0
        %1551 = vmatpush.msra.mxu0 0.0
        %1552 = vmatpush.msra.mxu0 0.0
        %1553 = vmatpush.msra.mxu0 0.0
        %1554 = vmatpush.msra.mxu0 0.0
        %1555 = vmatpush.msra.mxu0 %v541
        %1556 = vmatpush.msra.mxu0 %v540
        %1557 = vmatpush.msra.mxu0 %v539
        %1558 = vmatpush.msra.mxu0 %v538
        %1559 = vmatmul.f32.gmra.mxu0 %v1541
        %v1560 = vpop.f32.mrf.mxu0
        %v1561 = vadd.f32 0.0, %v1560
        %1562 = vdwg.mxu0
        %v1563 = vadd.f32 %v1400, %v1423
        %v1564 = vadd.f32 %v1563, %v1446
        %v1565 = vadd.f32 %v1564, %v1469
        %v1566 = vadd.f32 %v1565, %v1492
        %v1567 = vadd.f32 %v1566, %v1515
        %v1568 = vadd.f32 %v1567, %v1538
        %v1569 = vadd.f32 %v1568, %v1561
        %v1570 = vld [vmem:[%s5] sm:$0x1]
        %v1572 = vperm.slane %v1570, 0
        %v1574 = vadd.f32 %v1058, %v1572
        %v1575 = vadd.f32 %v1569, %v1572
        %v1576 = vld [vmem:[%s499] sm:$0xff]
        %v1577 = vld [vmem:[%s499 + $0x8] sm:$0xff]
        %v1578 = vadd.f32 %v1574, %v1576
        %v1579 = vadd.f32 %v1575, %v1577
        %v1580 = vsel %vm544, %v1578, 0.0
        %1581 = vadd.xlane.f32.xlu0 %v1580
        %v1582 = vpop.xlane.xlu0 %1581
        %v1583 = vsel %vm544, %v1579, 0.0
        %1584 = vadd.xlane.f32.xlu0 %v1583
        %v1585 = vpop.xlane.xlu0 %1584
        %v1586 = vrcp.pop 32.0
        %v1587 = vmul.f32 32.0, %v1586
        %v1588 = vsub.f32 1.0, %v1587
        %v1589 = vmul.f32 %v1586, %v1588
        %v1590 = vadd.f32 %v1586, %v1589
        %vm1591 = vweird.f32 %v1586
        %v1592 = vsel %vm1591, %v1586, %v1590
        %v1593 = vmul.f32 %v1582, %v1592
        %v1594 = vmul.f32 %v1585, %v1592
        %v1595 = vsub.f32 %v1578, %v1593
        %v1596 = vsub.f32 %v1579, %v1594
        %v1597 = vmul.f32 %v1595, %v1595
        %v1598 = vmul.f32 %v1596, %v1596
        %v1599 = vsel %vm544, %v1597, 0.0
        %1600 = vadd.xlane.f32.xlu0 %v1599
        %v1601 = vpop.xlane.xlu0 %1600
        %v1602 = vsel %vm544, %v1598, 0.0
        %1603 = vadd.xlane.f32.xlu0 %v1602
        %v1604 = vpop.xlane.xlu0 %1603
        %v1605 = vmul.f32 %v1601, %v1592
        %v1606 = vmul.f32 %v1604, %v1592
        %v1607 = vadd.f32 %v1605, 1e-05
        %v1608 = vadd.f32 %v1606, 1e-05
        %v1609 = vrsqrt.pop %v1607
        %v1610 = vmul.f32 %v1609, %v1607
        %v1611 = vmul.f32 %v1610, %v1609
        %v1612 = vmul.f32 0.5, %v1611
        %v1613 = vsub.f32 1.5, %v1612
        %v1614 = vmul.f32 %v1609, %v1613
        %vm1615 = vweird.f32 %v1607
        %vm1616 = vweird.f32 %v1609
        %vm1617 = vmor %vm1615, %vm1616
        %v1618 = vsel %vm1617, %v1609, %v1614
        %v1619 = vrsqrt.pop %v1608
        %v1620 = vmul.f32 %v1619, %v1608
        %v1621 = vmul.f32 %v1620, %v1619
        %v1622 = vmul.f32 0.5, %v1621
        %v1623 = vsub.f32 1.5, %v1622
        %v1624 = vmul.f32 %v1619, %v1623
        %vm1625 = vweird.f32 %v1608
        %vm1626 = vweird.f32 %v1619
        %vm1627 = vmor %vm1625, %vm1626
        %v1628 = vsel %vm1627, %v1619, %v1624
        %v1629 = vmul.f32 %v1595, %v1618
        %v1630 = vmul.f32 %v1596, %v1628
        %v1631 = vld [vmem:[%s6] sm:$0x1]
        %v1633 = vperm.slane %v1631, 0
        %v1635 = vmul.f32 %v1629, %v1633
        %v1636 = vmul.f32 %v1630, %v1633
        %v1637 = vld [vmem:[%s7] sm:$0x1]
        %v1639 = vperm.slane %v1637, 0
        %v1641 = vadd.f32 %v1635, %v1639
        %v1642 = vadd.f32 %v1636, %v1639
        %v1643 = vld [vmem:[%s8] sm:$0xff]
        %v1644 = vld [vmem:[%s8 + $0x8] sm:$0xff]
        %v1645 = vld [vmem:[%s8 + $0x10] sm:$0xff]
        %v1646 = vld [vmem:[%s8 + $0x18] sm:$0xff]
        %v1647 = vld [vmem:[%s9] sm:$0x1]
        %v1649 = vperm.slane %v1647, 0
        %v1652 = vsel %vm544, %v1641, 0
        %v1655 = vsel %vm544, %v1642, 0
        %1657 = vmatpush.msra.mxu0 0.0
        %1658 = vmatpush.msra.mxu0 0.0
        %1659 = vmatpush.msra.mxu0 0.0
        %1660 = vmatpush.msra.mxu0 0.0
        %1661 = vmatpush.msra.mxu0 0.0
        %1662 = vmatpush.msra.mxu0 0.0
        %1663 = vmatpush.msra.mxu0 0.0
        %1664 = vmatpush.msra.mxu0 0.0
        %1665 = vmatpush.msra.mxu0 0.0
        %1666 = vmatpush.msra.mxu0 0.0
        %1667 = vmatpush.msra.mxu0 0.0
        %1668 = vmatpush.msra.mxu0 0.0
        %1669 = vmatpush.msra.mxu0 %v1646
        %1670 = vmatpush.msra.mxu0 %v1645
        %1671 = vmatpush.msra.mxu0 %v1644
        %1672 = vmatpush.msra.mxu0 %v1643
        %1673 = vmatmul.f32.gmra.mxu0 %v1652
        %v1674 = vpop.f32.mrf.mxu0
        %v1675 = vadd.f32 %v1649, %v1674
        %1676 = vmatmul.f32.gmra.mxu0 %v1655
        %v1677 = vpop.f32.mrf.mxu0
        %v1678 = vadd.f32 %v1649, %v1677
        %1679 = vdwg.mxu0
        %v1680 = vmax.f32 %v1675, 0.0
        %v1681 = vmax.f32 %v1678, 0.0
        %v1682 = vld [vmem:[%s10] sm:$0xff]
        %v1683 = vld [vmem:[%s10 + $0x8] sm:$0xff]
        %v1684 = vld [vmem:[%s10 + $0x10] sm:$0xff]
        %v1685 = vld [vmem:[%s10 + $0x18] sm:$0xff]
        %v1686 = vld [vmem:[%s10 + $0x20] sm:$0xff]
        %v1687 = vld [vmem:[%s10 + $0x28] sm:$0xff]
        %v1688 = vld [vmem:[%s10 + $0x30] sm:$0xff]
        %v1689 = vld [vmem:[%s10 + $0x38] sm:$0xff]
        %v1690 = vld [vmem:[%s10 + $0x40] sm:$0xff]
        %v1691 = vld [vmem:[%s10 + $0x48] sm:$0xff]
        %v1692 = vld [vmem:[%s10 + $0x50] sm:$0xff]
        %v1693 = vld [vmem:[%s10 + $0x58] sm:$0xff]
        %v1694 = vld [vmem:[%s10 + $0x60] sm:$0xff]
        %v1695 = vld [vmem:[%s10 + $0x68] sm:$0xff]
        %v1696 = vld [vmem:[%s10 + $0x70] sm:$0xff]
        %v1697 = vld [vmem:[%s10 + $0x78] sm:$0xff]
        %v1698 = vld [vmem:[%s11] sm:$0x1]
        %v1700 = vperm.slane %v1698, 0
        %1702 = vmatpush.msra.mxu0 %v1697
        %1703 = vmatpush.msra.mxu0 %v1696
        %1704 = vmatpush.msra.mxu0 %v1695
        %1705 = vmatpush.msra.mxu0 %v1694
        %1706 = vmatpush.msra.mxu0 %v1693
        %1707 = vmatpush.msra.mxu0 %v1692
        %1708 = vmatpush.msra.mxu0 %v1691
        %1709 = vmatpush.msra.mxu0 %v1690
        %1710 = vmatpush.msra.mxu0 %v1689
        %1711 = vmatpush.msra.mxu0 %v1688
        %1712 = vmatpush.msra.mxu0 %v1687
        %1713 = vmatpush.msra.mxu0 %v1686
        %1714 = vmatpush.msra.mxu0 %v1685
        %1715 = vmatpush.msra.mxu0 %v1684
        %1716 = vmatpush.msra.mxu0 %v1683
        %1717 = vmatpush.msra.mxu0 %v1682
        %1718 = vmatmul.f32.gmra.mxu0 %v1680
        %v1719 = vpop.f32.mrf.mxu0
        %v1720 = vadd.f32 %v1700, %v1719
        %1721 = vmatmul.f32.gmra.mxu0 %v1681
        %v1722 = vpop.f32.mrf.mxu0
        %v1723 = vadd.f32 %v1700, %v1722
        %1724 = vdwg.mxu0
        %v1725 = vadd.f32 %v1720, %v1641
        %v1726 = vadd.f32 %v1723, %v1642
        %v1727 = vsel %vm544, %v1725, 0.0
        %1728 = vadd.xlane.f32.xlu0 %v1727
        %v1729 = vpop.xlane.xlu0 %1728
        %v1730 = vsel %vm544, %v1726, 0.0
        %1731 = vadd.xlane.f32.xlu0 %v1730
        %v1732 = vpop.xlane.xlu0 %1731
        %v1733 = vmul.f32 %v1729, %v1592
        %v1734 = vmul.f32 %v1732, %v1592
        %v1735 = vsub.f32 %v1725, %v1733
        %v1736 = vsub.f32 %v1726, %v1734
        %v1737 = vmul.f32 %v1735, %v1735
        %v1738 = vmul.f32 %v1736, %v1736
        %v1739 = vsel %vm544, %v1737, 0.0
        %1740 = vadd.xlane.f32.xlu0 %v1739
        %v1741 = vpop.xlane.xlu0 %1740
        %v1742 = vsel %vm544, %v1738, 0.0
        %1743 = vadd.xlane.f32.xlu0 %v1742
        %v1744 = vpop.xlane.xlu0 %1743
        %v1745 = vmul.f32 %v1741, %v1592
        %v1746 = vmul.f32 %v1744, %v1592
        %v1747 = vadd.f32 %v1745, 1e-05
        %v1748 = vadd.f32 %v1746, 1e-05
        %v1749 = vrsqrt.pop %v1747
        %v1750 = vmul.f32 %v1749, %v1747
        %v1751 = vmul.f32 %v1750, %v1749
        %v1752 = vmul.f32 0.5, %v1751
        %v1753 = vsub.f32 1.5, %v1752
        %v1754 = vmul.f32 %v1749, %v1753
        %vm1755 = vweird.f32 %v1747
        %vm1756 = vweird.f32 %v1749
        %vm1757 = vmor %vm1755, %vm1756
        %v1758 = vsel %vm1757, %v1749, %v1754
        %v1759 = vrsqrt.pop %v1748
        %v1760 = vmul.f32 %v1759, %v1748
        %v1761 = vmul.f32 %v1760, %v1759
        %v1762 = vmul.f32 0.5, %v1761
        %v1763 = vsub.f32 1.5, %v1762
        %v1764 = vmul.f32 %v1759, %v1763
        %vm1765 = vweird.f32 %v1748
        %vm1766 = vweird.f32 %v1759
        %vm1767 = vmor %vm1765, %vm1766
        %v1768 = vsel %vm1767, %v1759, %v1764
        %v1769 = vmul.f32 %v1735, %v1758
        %v1770 = vmul.f32 %v1736, %v1768
        %v1771 = vld [vmem:[%s12] sm:$0x1]
        %v1773 = vperm.slane %v1771, 0
        %v1775 = vmul.f32 %v1769, %v1773
        %v1776 = vmul.f32 %v1770, %v1773
        %v1777 = vld [vmem:[%s13] sm:$0x1]
        %v1779 = vperm.slane %v1777, 0
        %v1781 = vadd.f32 %v1775, %v1779
        %v1782 = vadd.f32 %v1776, %v1779
        %1783 = vst.msk [vmem:[%s494] sm:$0xff] %vm544, %v1781
        %1784 = vst.msk [vmem:[%s494 + $0x8] sm:$0xff] %vm544, %v1782
        %s1785 = sand.u32 %s341, 1
        %s1786 = scalar_lea.sflag [#allocation4], %s1785
        %s1787 = sand.u32 %s341, 1
        %s1788 = smul.addr %s1787, 16
        %s1789 = scalar_lea.vmem [#allocation5], %s1788
        // Predicated region
        $region81: #{tpu_custom_call.1} parent=75 // pred_check
          %p1790 = pneg %p351
        $region82: #{tpu_custom_call.1} parent=75 // pred_check_branch
          %1792 = sbr.rel (%p1790) target = $region84
        $region83: #{tpu_custom_call.1} parent=75 // pred_region
          %s1793 = smul.u32 2, %s29
          %1795 = vsyncadd %s1786, 0
          %s1796 = smul.addr %s1793, 8
          %s1797 = scalar_lea.hbm %s14, %s1796
          %s1798 = sshll.u32 %s1789, 4
          %s1799 = int_to_ptr.vmem [resolvable:$true] %s1798
          %s1800 = sshll.u32 %s1797, 4
          %s1801 = int_to_ptr.hbm [resolvable:$true] %s1800
          %1806 = dma.vmem_to_hbm [thread:$0]  %s1799, 256, %s1801, %s1786, 128, 128, 8
        $region84: #{tpu_custom_call.1} parent=75 // pred_fallthru
          _
      $region76: #{tpu_custom_call.1} parent=5 // pred_fallthru
        _
      %p1807 = scmp.le.s32.totalorder 2, %s24
      // Predicated region
      $region85: #{tpu_custom_call.1} parent=5 // pred_check
        %p1808 = pneg %p1807
      $region86: #{tpu_custom_call.1} parent=5 // pred_check_branch
        %1810 = sbr.rel (%p1808) target = $region88
      $region87: #{tpu_custom_call.1} parent=5 // pred_region
        %s1811 = ssub.s32 %s24, 2
        // Predicated region
        $region89: #{tpu_custom_call.1} parent=87 // pred_check
          %p1812 = pneg %p357
        $region90: #{tpu_custom_call.1} parent=87 // pred_check_branch
          %1814 = sbr.rel (%p1812) target = $region92
        $region91: #{tpu_custom_call.1} parent=87 // pred_region
          %s1815 = sand.u32 %s342, 1
          %s1816 = scalar_lea.sflag [#allocation4], %s1815
          %s1817 = sand.u32 %s342, 1
          %s1818 = smul.addr %s1817, 16
          %s1819 = scalar_lea.vmem [#allocation5], %s1818
          %1821 = dma.done %s1816, 256
        $region92: #{tpu_custom_call.1} parent=87 // pred_fallthru
          _
      $region88: #{tpu_custom_call.1} parent=5 // pred_fallthru
        _
    $region6: #{tpu_custom_call.1} parent=1 // loop_footer
      %s28 = sadd.s32 1, %s24
    $region7: #{tpu_custom_call.1} parent=1 // loop_footer_branch
      %23 = sbr.rel target = $region3
    $region8: #{tpu_custom_call.1} parent=1 // loop_exit
      _
    %1822 = vsyncpa [#allocation3], 1
    %s1823 = scalar_lea.sflag [#allocation3], 1
    %1824 = vsyncpa %s1823, 1
    %1825 = vsyncpa [#allocation4], 1
    %s1826 = scalar_lea.sflag [#allocation4], 1
    %1827 = vsyncpa %s1826, 1

</llo_original>
